<compile_context>
chip_gen: v6e
topology: v6e:2x2x1
jax: 0.10.0
libtpu: 0.0.40
codegen_flags: <defaults>
</compile_context>

<pallas_src>
import jax
import jax.numpy as jnp
from jax.experimental import pallas as pl
from jax.experimental.pallas import tpu as pltpu

EPS = 1e-5          # BatchNorm2d default eps
NEG_SLOPE = 0.2     # LeakyReLU slope
VMEM_LIMIT = 32 * 1024 * 1024   # fits v5e/v6e defaults and v7x's 64 MiB physical with headroom


# ----------------------------- Pallas kernels -----------------------------

def _down_kernel(p_ref, w_ref, o_ref):
    """Downsampling Conv2d tile (im2col matmul, bf16 in / f32 acc) with the following ReLU fused."""
    acc = jnp.dot(p_ref[...], w_ref[...], preferred_element_type=jnp.float32)
    o_ref[...] = jnp.maximum(acc, 0.0)          # 'uprelu' fused into the epilogue


def _up_kernel(p_ref, w_ref, u_ref, stats_ref):
    """ConvTranspose2d tile (as im2col matmul) + per-tile partial BN statistics (sum, sumsq)."""
    z = jnp.dot(p_ref[...], w_ref[...], preferred_element_type=jnp.float32)   # (tm, Cp) f32
    u_ref[...] = z
    s = jnp.sum(z, axis=0, keepdims=True)        # (1, Cp)
    ss = jnp.sum(z * z, axis=0, keepdims=True)   # (1, Cp)
    stats_ref[...] = jnp.concatenate([s, ss], axis=0)[None]    # (1, 2, Cp)


def _bn_apply_kernel(u_ref, scale_ref, shift_ref, o_ref):
    """Apply precomputed per-channel scale/shift (exact batch-stat BatchNorm2d)."""
    o_ref[...] = u_ref[...] * scale_ref[...] + shift_ref[...]


# --------------------------- pallas_call wrappers ---------------------------

def _round_up(v, m):
    return (v + m - 1) // m * m


def _tile_m(m):
    """Row-tile size: multiple of 8, capped so real UNet shapes stay well inside VMEM."""
    for tm in (256, 128):
        if m >= tm:
            return tm
    return _round_up(m, 8)


def _pad2(a, rows, cols):
    return jnp.pad(a, ((0, rows - a.shape[0]), (0, cols - a.shape[1])))


def _compiler_params():
    return pltpu.CompilerParams(dimension_semantics=("parallel",),
                                vmem_limit_bytes=VMEM_LIMIT)


def _down_conv_pallas(patches, w_mat, tm):
    mp, kp = patches.shape
    cp = w_mat.shape[1]
    cost = pl.CostEstimate(flops=2 * mp * kp * cp, transcendentals=0,
                           bytes_accessed=mp * kp * 2 + kp * cp * 2 + mp * cp * 4)
    return pl.pallas_call(
        _down_kernel,
        out_shape=jax.ShapeDtypeStruct((mp, cp), jnp.float32),
        grid=(mp // tm,),
        in_specs=[pl.BlockSpec((tm, kp), lambda i: (i, 0)),
                  pl.BlockSpec((kp, cp), lambda i: (0, 0))],
        out_specs=pl.BlockSpec((tm, cp), lambda i: (i, 0)),
        compiler_params=_compiler_params(),
        cost_estimate=cost,
    )(patches, w_mat)


def _up_conv_pallas(patches, w_mat, tm):
    mp, kp = patches.shape
    cp = w_mat.shape[1]
    nt = mp // tm
    cost = pl.CostEstimate(flops=2 * mp * kp * cp, transcendentals=0,
                           bytes_accessed=mp * kp * 2 + kp * cp * 2 + mp * cp * 4 + nt * 2 * cp * 4)
    return pl.pallas_call(
        _up_kernel,
        out_shape=(jax.ShapeDtypeStruct((mp, cp), jnp.float32),
                   jax.ShapeDtypeStruct((nt, 2, cp), jnp.float32)),
        grid=(nt,),
        in_specs=[pl.BlockSpec((tm, kp), lambda i: (i, 0)),
                  pl.BlockSpec((kp, cp), lambda i: (0, 0))],
        out_specs=(pl.BlockSpec((tm, cp), lambda i: (i, 0)),
                   pl.BlockSpec((1, 2, cp), lambda i: (i, 0, 0))),
        compiler_params=_compiler_params(),
        cost_estimate=cost,
    )(patches, w_mat)


def _bn_apply_pallas(u, scale, shift, tm):
    mp, cp = u.shape
    cost = pl.CostEstimate(flops=2 * mp * cp, transcendentals=0,
                           bytes_accessed=2 * mp * cp * 4 + 2 * cp * 4)
    return pl.pallas_call(
        _bn_apply_kernel,
        out_shape=jax.ShapeDtypeStruct((mp, cp), jnp.float32),
        grid=(mp // tm,),
        in_specs=[pl.BlockSpec((tm, cp), lambda i: (i, 0)),
                  pl.BlockSpec((1, cp), lambda i: (0, 0)),
                  pl.BlockSpec((1, cp), lambda i: (0, 0))],
        out_specs=pl.BlockSpec((tm, cp), lambda i: (i, 0)),
        compiler_params=_compiler_params(),
        cost_estimate=cost,
    )(u, scale, shift)


# ------------------------------- JAX glue ----------------------------------

def _extract_patches(x, k, stride):
    """x: (N, C, Hp, Wp) already padded -> (N*Ho*Wo, C*k*k) patches (row-major over n, ho, wo)."""
    n, c, hp, wp = x.shape
    ho = (hp - k) // stride + 1
    wo = (wp - k) // stride + 1
    ih = (jnp.arange(ho) * stride)[:, None] + jnp.arange(k)[None, :]   # (ho, k)
    iw = (jnp.arange(wo) * stride)[:, None] + jnp.arange(k)[None, :]   # (wo, k)
    p = x[:, :, ih[:, None, :, None], iw[None, :, None, :]]            # (N, C, ho, wo, k, k)
    p = jnp.transpose(p, (0, 2, 3, 1, 4, 5)).reshape(n * ho * wo, c * k * k)
    return p, ho, wo


def unet_innermost_forward(x, w_down, w_up_t, gamma, beta):
    """x: (N, Cin, H, W); w_down: (Cinner, Cin, 4, 4); w_up_t: (Cinner, Cout, 4, 4) (PyTorch ConvT)."""
    n, cin, h, w = x.shape
    cinner = w_down.shape[0]
    cout = w_up_t.shape[1]

    # ---- down: LeakyReLU(0.2) on the *pre-im2col* tensor (no 16x redundant VPU work),
    #            Conv2d(k=4, s=2, p=1, bias=False) as tiled bf16 MXU matmul, ReLU fused in.
    xl = jnp.where(x >= 0, x, NEG_SLOPE * x)
    xp = jnp.pad(xl, ((0, 0), (0, 0), (1, 1), (1, 1)))
    patches_d, ho, wo = _extract_patches(xp, 4, 2)                     # (M_d, Cin*16)
    m_d, k_d = patches_d.shape
    wd_mat = w_down.reshape(cinner, cin * 16).T                        # (Cin*16, Cinner)

    tm_d = _tile_m(m_d)
    mp_d = _round_up(m_d, tm_d)
    kp_d = _round_up(k_d, 128)                                         # pad K to full lanes
    cp_i = _round_up(cinner, 128)                                      # lane-dense output
    patches_d = _pad2(patches_d, mp_d, kp_d).astype(jnp.bfloat16)
    wd_mat = _pad2(wd_mat, kp_d, cp_i).astype(jnp.bfloat16)

    d = _down_conv_pallas(patches_d, wd_mat, tm_d)                     # (Mp_d, Cp_i) f32, ReLU'd
    d = d[:m_d, :cinner].reshape(n, ho, wo, cinner).transpose(0, 3, 1, 2)

    # ---- up: ConvTranspose2d(k=4, s=2, p=1, bias=False) as conv on the 2x-dilated input ----
    # TODO(synk): sub-pixel 4-phase decomposition + in-kernel patch build would avoid the
    # 75%-zero dilated input and the 16x im2col HBM inflation; down->up could stay in VMEM.
    d_dil = jnp.zeros((n, cinner, 2 * ho - 1, 2 * wo - 1), d.dtype)
    d_dil = d_dil.at[:, :, ::2, ::2].set(d)
    d_dil = jnp.pad(d_dil, ((0, 0), (0, 0), (2, 2), (2, 2)))
    patches_u, hu, wu = _extract_patches(d_dil, 4, 1)                  # (M_u, Cinner*16)
    m_u, k_u = patches_u.shape
    w_eq = jnp.transpose(w_up_t[:, :, ::-1, ::-1], (1, 0, 2, 3))       # (Cout, Cinner, 4, 4)
    wu_mat = w_eq.reshape(cout, cinner * 16).T                         # (Cinner*16, Cout)

    tm_u = _tile_m(m_u)
    mp_u = _round_up(m_u, tm_u)
    kp_u = _round_up(k_u, 128)
    cp_o = _round_up(cout, 128)
    patches_u = _pad2(patches_u, mp_u, kp_u).astype(jnp.bfloat16)
    wu_mat = _pad2(wu_mat, kp_u, cp_o).astype(jnp.bfloat16)

    u, stats = _up_conv_pallas(patches_u, wu_mat, tm_u)                # u: (Mp_u, Cp_o) pre-BN

    # ---- BatchNorm2d (train-mode batch statistics) from cross-tile partial sums ----
    # Zero-padded rows/columns contribute 0 to sum and sumsq, so dividing by the real M is exact.
    tot = jnp.sum(stats, axis=0)                                       # (2, Cp_o)
    mean = tot[0] / m_u
    var = tot[1] / m_u - mean * mean
    inv = jax.lax.rsqrt(var + EPS)
    gpad = jnp.zeros((cp_o,), jnp.float32).at[:cout].set(gamma.astype(jnp.float32))
    bpad = jnp.zeros((cp_o,), jnp.float32).at[:cout].set(beta.astype(jnp.float32))
    scale = (gpad * inv).reshape(1, cp_o)
    shift = (bpad - mean * gpad * inv).reshape(1, cp_o)

    y = _bn_apply_pallas(u, scale, shift, tm_u)                        # (Mp_u, Cp_o) lane-dense
    y = y[:m_u, :cout].reshape(n, hu, wu, cout).transpose(0, 3, 1, 2)  # (N, Cout, H, W)

    # ---- skip connection ----
    return jnp.concatenate([x, y], axis=1)                             # (N, Cin + Cout, H, W)


# ---------------------------- pure-JAX reference ----------------------------

def reference(x, w_down, w_up_t, gamma, beta):
    xl = jnp.where(x >= 0, x, NEG_SLOPE * x)
    d = jax.lax.conv_general_dilated(xl, w_down, (2, 2), ((1, 1), (1, 1)),
                                     dimension_numbers=('NCHW', 'OIHW', 'NCHW'))
    dr = jnp.maximum(d, 0.0)
    w_eq = jnp.transpose(w_up_t[:, :, ::-1, ::-1], (1, 0, 2, 3))
    u = jax.lax.conv_general_dilated(dr, w_eq, (1, 1), ((2, 2), (2, 2)),
                                     lhs_dilation=(2, 2),
                                     dimension_numbers=('NCHW', 'OIHW', 'NCHW'))
    mean = u.mean(axis=(0, 2, 3), keepdims=True)
    var = ((u - mean) ** 2).mean(axis=(0, 2, 3), keepdims=True)
    un = (u - mean) / jnp.sqrt(var + EPS) * gamma.reshape(1, -1, 1, 1) + beta.reshape(1, -1, 1, 1)
    return jnp.concatenate([x, un], axis=1)


# ---------------------------------- main ------------------------------------

if __name__ == "__main__":
    # Shapes: innermost block with outer_nc = input_nc = 4, inner_nc = 8.
    N, OUTER_NC, INNER_NC, H, W = 2, 4, 8, 16, 16

    key = jax.random.PRNGKey(0)
    kx, kd, ku = jax.random.split(key, 3)
    x = jax.random.normal(kx, (N, OUTER_NC, H, W), dtype=jnp.float32)
    # Conv2d(input_nc, inner_nc, 4) weight: (inner_nc, input_nc, 4, 4)
    w_down = 0.1 * jax.random.normal(kd, (INNER_NC, OUTER_NC, 4, 4), dtype=jnp.float32)
    # ConvTranspose2d(inner_nc, outer_nc, 4) weight: (inner_nc, outer_nc, 4, 4)
    w_up_t = 0.1 * jax.random.normal(ku, (INNER_NC, OUTER_NC, 4, 4), dtype=jnp.float32)
    # BatchNorm2d(outer_nc) affine params at PyTorch default init.
    gamma = jnp.ones((OUTER_NC,), dtype=jnp.float32)
    beta = jnp.zeros((OUTER_NC,), dtype=jnp.float32)

    out = jax.jit(unet_innermost_forward)(x, w_down, w_up_t, gamma, beta)
    out = jax.block_until_ready(out)

    ref = reference(x, w_down, w_up_t, gamma, beta)
    assert out.shape == (N, OUTER_NC + OUTER_NC, H, W), out.shape
    # Tolerance loosened vs the f32-only version because matmul inputs are deliberately bf16
    # (MXU-native); accumulation and BN statistics remain f32.
    err = float(jnp.max(jnp.abs(out - ref)))
    assert jnp.allclose(out, ref, rtol=5e-2, atol=5e-2), err

    print("KERNEL_OK")
</pallas_src>

<mosaic_0001>
module attributes {stable_mosaic.version = 11 : i64} {
  func.func @_down_kernel(%arg0: i32, %arg1: memref<128x128xbf16, #tpu.memory_space<vmem>>, %arg2: memref<128x128xbf16, #tpu.memory_space<vmem>>, %arg3: memref<128x128xf32, #tpu.memory_space<vmem>>) attributes {dimension_semantics = [#tpu.dimension_semantics<parallel>], iteration_bounds = array<i64: 1>, scalar_prefetch = 0 : i64, scratch_operands = 0 : i64, tpu.core_type = #tpu.core_type<tc>, window_params = [{transform_indices = @transform_0, window_bounds = array<i64: 128, 128>}, {pipeline_mode = #tpu.pipeline_mode<synchronous>, transform_indices = @transform_1, window_bounds = array<i64: 128, 128>}, {transform_indices = @transform_2, window_bounds = array<i64: 128, 128>}]} {
    %c0 = arith.constant 0 : index
    %c0_0 = arith.constant 0 : index
    %0 = vector.load %arg1[%c0, %c0_0] : memref<128x128xbf16, #tpu.memory_space<vmem>>, vector<128x128xbf16>
    %c0_1 = arith.constant 0 : index
    %c0_2 = arith.constant 0 : index
    %1 = vector.load %arg2[%c0_1, %c0_2] : memref<128x128xbf16, #tpu.memory_space<vmem>>, vector<128x128xbf16>
    %cst = arith.constant dense<0.000000e+00> : vector<128x128xf32>
    %2 = tpu.matmul %0, %1, %cst {dimension_numbers = #tpu.dot_dimension_numbers<[1], [0], [0], [1], [0, 0, 1, 1], [], []>} : vector<128x128xbf16>, vector<128x128xbf16>, vector<128x128xf32> -> vector<128x128xf32>
    %cst_3 = arith.constant 0.000000e+00 : f32
    %3 = vector.broadcast %cst_3 : f32 to vector<128x128xf32>
    %4 = arith.maximumf %2, %3 : vector<128x128xf32>
    %c0_4 = arith.constant 0 : index
    %c0_5 = arith.constant 0 : index
    %5 = vector.load %arg3[%c0_4, %c0_5] : memref<128x128xf32, #tpu.memory_space<vmem>>, vector<128x128xf32>
    tpu.vector_store %arg3[%c0_4, %c0_5], %4 {strides = array<i32>} : memref<128x128xf32, #tpu.memory_space<vmem>>, vector<128x128xf32>,
    return
  }
  func.func @transform_0(%arg0: i32) -> (i32, i32) {
    %c0_i32 = arith.constant 0 : i32
    %c0_i32_0 = arith.constant 0 : i32
    return %arg0, %c0_i32 : i32, i32
  }
  func.func @transform_1(%arg0: i32) -> (i32, i32) {
    %c0_i32 = arith.constant 0 : i32
    %c0_i32_0 = arith.constant 0 : i32
    %c0_i32_1 = arith.constant 0 : i32
    return %c0_i32, %c0_i32_0 : i32, i32
  }
  func.func @transform_2(%arg0: i32) -> (i32, i32) {
    %c0_i32 = arith.constant 0 : i32
    %c0_i32_0 = arith.constant 0 : i32
    return %arg0, %c0_i32 : i32, i32
  }
}

module attributes {stable_mosaic.version = 11 : i64} {
  func.func @_bn_apply_kernel(%arg0: i32, %arg1: memref<256x128xf32, #tpu.memory_space<vmem>>, %arg2: memref<1x128xf32, #tpu.memory_space<vmem>>, %arg3: memref<1x128xf32, #tpu.memory_space<vmem>>, %arg4: memref<256x128xf32, #tpu.memory_space<vmem>>) attributes {dimension_semantics = [#tpu.dimension_semantics<parallel>], iteration_bounds = array<i64: 2>, scalar_prefetch = 0 : i64, scratch_operands = 0 : i64, tpu.core_type = #tpu.core_type<tc>, window_params = [{transform_indices = @transform_0, window_bounds = array<i64: 256, 128>}, {pipeline_mode = #tpu.pipeline_mode<synchronous>, transform_indices = @transform_1, window_bounds = array<i64: 1, 128>}, {pipeline_mode = #tpu.pipeline_mode<synchronous>, transform_indices = @transform_2, window_bounds = array<i64: 1, 128>}, {transform_indices = @transform_3, window_bounds = array<i64: 256, 128>}]} {
    %c0 = arith.constant 0 : index
    %c0_0 = arith.constant 0 : index
    %0 = vector.load %arg1[%c0, %c0_0] : memref<256x128xf32, #tpu.memory_space<vmem>>, vector<256x128xf32>
    %c0_1 = arith.constant 0 : index
    %c0_2 = arith.constant 0 : index
    %1 = vector.load %arg2[%c0_1, %c0_2] : memref<1x128xf32, #tpu.memory_space<vmem>>, vector<1x128xf32>
    %2 = vector.broadcast %1 : vector<1x128xf32> to vector<256x128xf32>
    %3 = arith.mulf %0, %2 : vector<256x128xf32>
    %c0_3 = arith.constant 0 : index
    %c0_4 = arith.constant 0 : index
    %4 = vector.load %arg3[%c0_3, %c0_4] : memref<1x128xf32, #tpu.memory_space<vmem>>, vector<1x128xf32>
    %5 = vector.broadcast %4 : vector<1x128xf32> to vector<256x128xf32>
    %6 = arith.addf %3, %5 : vector<256x128xf32>
    %c0_5 = arith.constant 0 : index
    %c0_6 = arith.constant 0 : index
    %7 = vector.load %arg4[%c0_5, %c0_6] : memref<256x128xf32, #tpu.memory_space<vmem>>, vector<256x128xf32>
    tpu.vector_store %arg4[%c0_5, %c0_6], %6 {strides = array<i32>} : memref<256x128xf32, #tpu.memory_space<vmem>>, vector<256x128xf32>,
    return
  }
  func.func @transform_0(%arg0: i32) -> (i32, i32) {
    %c0_i32 = arith.constant 0 : i32
    %c0_i32_0 = arith.constant 0 : i32
    return %arg0, %c0_i32 : i32, i32
  }
  func.func @transform_1(%arg0: i32) -> (i32, i32) {
    %c0_i32 = arith.constant 0 : i32
    %c0_i32_0 = arith.constant 0 : i32
    %c0_i32_1 = arith.constant 0 : i32
    return %c0_i32, %c0_i32_0 : i32, i32
  }
  func.func @transform_2(%arg0: i32) -> (i32, i32) {
    %c0_i32 = arith.constant 0 : i32
    %c0_i32_0 = arith.constant 0 : i32
    %c0_i32_1 = arith.constant 0 : i32
    return %c0_i32, %c0_i32_0 : i32, i32
  }
  func.func @transform_3(%arg0: i32) -> (i32, i32) {
    %c0_i32 = arith.constant 0 : i32
    %c0_i32_0 = arith.constant 0 : i32
    return %arg0, %c0_i32 : i32, i32
  }
}

module attributes {stable_mosaic.version = 11 : i64} {
  func.func @_up_kernel(%arg0: i32, %arg1: memref<256x128xbf16, #tpu.memory_space<vmem>>, %arg2: memref<128x128xbf16, #tpu.memory_space<vmem>>, %arg3: memref<256x128xf32, #tpu.memory_space<vmem>>, %arg4: memref<1x2x128xf32, #tpu.memory_space<vmem>>) attributes {dimension_semantics = [#tpu.dimension_semantics<parallel>], iteration_bounds = array<i64: 2>, scalar_prefetch = 0 : i64, scratch_operands = 0 : i64, tpu.core_type = #tpu.core_type<tc>, window_params = [{transform_indices = @transform_0, window_bounds = array<i64: 256, 128>}, {pipeline_mode = #tpu.pipeline_mode<synchronous>, transform_indices = @transform_1, window_bounds = array<i64: 128, 128>}, {transform_indices = @transform_2, window_bounds = array<i64: 256, 128>}, {transform_indices = @transform_3, window_bounds = array<i64: 1, 2, 128>}]} {
    %c0 = arith.constant 0 : index
    %c0_0 = arith.constant 0 : index
    %0 = vector.load %arg1[%c0, %c0_0] : memref<256x128xbf16, #tpu.memory_space<vmem>>, vector<256x128xbf16>
    %c0_1 = arith.constant 0 : index
    %c0_2 = arith.constant 0 : index
    %1 = vector.load %arg2[%c0_1, %c0_2] : memref<128x128xbf16, #tpu.memory_space<vmem>>, vector<128x128xbf16>
    %cst = arith.constant dense<0.000000e+00> : vector<256x128xf32>
    %2 = tpu.matmul %0, %1, %cst {dimension_numbers = #tpu.dot_dimension_numbers<[1], [0], [0], [1], [0, 0, 1, 1], [], []>} : vector<256x128xbf16>, vector<128x128xbf16>, vector<256x128xf32> -> vector<256x128xf32>
    %c0_3 = arith.constant 0 : index
    %c0_4 = arith.constant 0 : index
    %3 = vector.load %arg3[%c0_3, %c0_4] : memref<256x128xf32, #tpu.memory_space<vmem>>, vector<256x128xf32>
    tpu.vector_store %arg3[%c0_3, %c0_4], %2 {strides = array<i32>} : memref<256x128xf32, #tpu.memory_space<vmem>>, vector<256x128xf32>,
    %cst_5 = arith.constant dense<0.000000e+00> : vector<128xf32>
    %4 = vector.multi_reduction <add>, %2, %cst_5 [0] : vector<256x128xf32> to vector<128xf32>
    %5 = vector.shape_cast %4 : vector<128xf32> to vector<1x128xf32>
    %6 = arith.mulf %2, %2 : vector<256x128xf32>
    %cst_6 = arith.constant dense<0.000000e+00> : vector<128xf32>
    %7 = vector.multi_reduction <add>, %6, %cst_6 [0] : vector<256x128xf32> to vector<128xf32>
    %8 = vector.shape_cast %7 : vector<128xf32> to vector<1x128xf32>
    %9 = tpu.concatenate %5, %8 in 0 : vector<1x128xf32>, vector<1x128xf32> -> vector<2x128xf32>
    %10 = vector.shape_cast %9 : vector<2x128xf32> to vector<1x2x128xf32>
    %c0_7 = arith.constant 0 : index
    %c0_8 = arith.constant 0 : index
    %c0_9 = arith.constant 0 : index
    %11 = vector.load %arg4[%c0_7, %c0_8, %c0_9] : memref<1x2x128xf32, #tpu.memory_space<vmem>>, vector<1x2x128xf32>
    tpu.vector_store %arg4[%c0_7, %c0_8, %c0_9], %10 {strides = array<i32>} : memref<1x2x128xf32, #tpu.memory_space<vmem>>, vector<1x2x128xf32>,
    return
  }
  func.func @transform_0(%arg0: i32) -> (i32, i32) {
    %c0_i32 = arith.constant 0 : i32
    %c0_i32_0 = arith.constant 0 : i32
    return %arg0, %c0_i32 : i32, i32
  }
  func.func @transform_1(%arg0: i32) -> (i32, i32) {
    %c0_i32 = arith.constant 0 : i32
    %c0_i32_0 = arith.constant 0 : i32
    %c0_i32_1 = arith.constant 0 : i32
    return %c0_i32, %c0_i32_0 : i32, i32
  }
  func.func @transform_2(%arg0: i32) -> (i32, i32) {
    %c0_i32 = arith.constant 0 : i32
    %c0_i32_0 = arith.constant 0 : i32
    return %arg0, %c0_i32 : i32, i32
  }
  func.func @transform_3(%arg0: i32) -> (i32, i32, i32) {
    %c0_i32 = arith.constant 0 : i32
    %c0_i32_0 = arith.constant 0 : i32
    %c0_i32_1 = arith.constant 0 : i32
    return %arg0, %c0_i32, %c0_i32_0 : i32, i32, i32
  }
}

</mosaic_0001>

<llo_original>
// kernel: unet_innermost_forward.3
$region0: #{unet_innermost_forward.3}
  #allocation0 [shape = 'u32[]', space=smem, size = 0x4, offset = 0x4, fixed_abs, tag = 'smem constant byte address 0x4 - core index']
  #allocation1 [shape = 'u32[144,128]{1,0:T(1,128)}', space=vmem, size = 0x12000, scoped, tag = 'internal scratch']
  %s0 = inlined_call_operand.vmem [shape: bf16[128,128], index: 0, kind: input, shape index: {}]
  %s1 = inlined_call_operand.vmem [shape: bf16[128,128], index: 1, kind: input, shape index: {}]
  %s2 = inlined_call_operand.vmem [shape: f32[128,128], index: 2, kind: output, shape index: {}]
  %s3 = sld [smem:[#allocation0]]
  $region18: #{unet_innermost_forward.3} parent=0
    _
  %s5 = ssub.s32 1, %s3
  %s6 = scalar_select 0, %s5, %s3
  // Predicated region
  $region2: #{unet_innermost_forward.3} parent=0 // pred_check
    _
  $region3: #{unet_innermost_forward.3} parent=0 // pred_check_branch
    %8 = sbr.rel (0) target = $region5
  $region4: #{unet_innermost_forward.3} parent=0 // pred_region
    _
  $region5: #{unet_innermost_forward.3} parent=0 // pred_fallthru
    _
  // Predicated region
  $region6: #{unet_innermost_forward.3} parent=0 // pred_check
    _
  $region7: #{unet_innermost_forward.3} parent=0 // pred_check_branch
    %10 = sbr.rel (0) target = $region9
  $region8: #{unet_innermost_forward.3} parent=0 // pred_region
    _
  $region9: #{unet_innermost_forward.3} parent=0 // pred_fallthru
    _
  %v12 = vld [vmem:[%s0] sm:$0xf]
  %v13 = vld [vmem:[%s0 + $0x4] sm:$0xf]
  %v14 = vld [vmem:[%s0 + $0x8] sm:$0xf]
  %v15 = vld [vmem:[%s0 + $0xc] sm:$0xf]
  %v16 = vld [vmem:[%s0 + $0x10] sm:$0xf]
  %v17 = vld [vmem:[%s0 + $0x14] sm:$0xf]
  %v18 = vld [vmem:[%s0 + $0x18] sm:$0xf]
  %v19 = vld [vmem:[%s0 + $0x1c] sm:$0xf]
  %v20 = vld [vmem:[%s0 + $0x20] sm:$0xf]
  %v21 = vld [vmem:[%s0 + $0x24] sm:$0xf]
  %v22 = vld [vmem:[%s0 + $0x28] sm:$0xf]
  %v23 = vld [vmem:[%s0 + $0x2c] sm:$0xf]
  %v24 = vld [vmem:[%s0 + $0x30] sm:$0xf]
  %v25 = vld [vmem:[%s0 + $0x34] sm:$0xf]
  %v26 = vld [vmem:[%s0 + $0x38] sm:$0xf]
  %v27 = vld [vmem:[%s0 + $0x3c] sm:$0xf]
  %v28 = vld [vmem:[%s1] sm:$0xf]
  %v29 = vld [vmem:[%s1 + $0x4] sm:$0xf]
  %v30 = vld [vmem:[%s1 + $0x8] sm:$0xf]
  %v31 = vld [vmem:[%s1 + $0xc] sm:$0xf]
  %v32 = vld [vmem:[%s1 + $0x10] sm:$0xf]
  %v33 = vld [vmem:[%s1 + $0x14] sm:$0xf]
  %v34 = vld [vmem:[%s1 + $0x18] sm:$0xf]
  %v35 = vld [vmem:[%s1 + $0x1c] sm:$0xf]
  %v36 = vld [vmem:[%s1 + $0x20] sm:$0xf]
  %v37 = vld [vmem:[%s1 + $0x24] sm:$0xf]
  %v38 = vld [vmem:[%s1 + $0x28] sm:$0xf]
  %v39 = vld [vmem:[%s1 + $0x2c] sm:$0xf]
  %v40 = vld [vmem:[%s1 + $0x30] sm:$0xf]
  %v41 = vld [vmem:[%s1 + $0x34] sm:$0xf]
  %v42 = vld [vmem:[%s1 + $0x38] sm:$0xf]
  %v43 = vld [vmem:[%s1 + $0x3c] sm:$0xf]
  %v60 = vunpack.c.l.b16 %v12
  %v61 = vunpack.c.l.b16 %v13
  %v62 = vunpack.c.l.b16 %v14
  %v63 = vunpack.c.l.b16 %v15
  %v64 = vunpack.c.l.b16 %v16
  %v65 = vunpack.c.l.b16 %v17
  %v66 = vunpack.c.l.b16 %v18
  %v67 = vunpack.c.l.b16 %v19
  %v68 = vunpack.c.l.b16 %v20
  %v69 = vunpack.c.l.b16 %v21
  %v70 = vunpack.c.l.b16 %v22
  %v71 = vunpack.c.l.b16 %v23
  %v72 = vunpack.c.l.b16 %v24
  %v73 = vunpack.c.l.b16 %v25
  %v74 = vunpack.c.l.b16 %v26
  %v75 = vunpack.c.l.b16 %v27
  %v76 = vpack.c.b16 %v61, %v60
  %v77 = vpack.c.b16 %v63, %v62
  %v78 = vpack.c.b16 %v65, %v64
  %v79 = vpack.c.b16 %v67, %v66
  %v80 = vpack.c.b16 %v69, %v68
  %v81 = vpack.c.b16 %v71, %v70
  %v82 = vpack.c.b16 %v73, %v72
  %v83 = vpack.c.b16 %v75, %v74
  %v108 = vunpack.c.l.b16 %v28
  %v109 = vunpack.c.l.b16 %v29
  %v110 = vunpack.c.l.b16 %v30
  %v111 = vunpack.c.l.b16 %v31
  %v112 = vunpack.c.l.b16 %v32
  %v113 = vunpack.c.l.b16 %v33
  %v114 = vunpack.c.l.b16 %v34
  %v115 = vunpack.c.l.b16 %v35
  %v116 = vunpack.c.l.b16 %v36
  %v117 = vunpack.c.l.b16 %v37
  %v118 = vunpack.c.l.b16 %v38
  %v119 = vunpack.c.l.b16 %v39
  %v120 = vunpack.c.l.b16 %v40
  %v121 = vunpack.c.l.b16 %v41
  %v122 = vunpack.c.l.b16 %v42
  %v123 = vunpack.c.l.b16 %v43
  %v124 = vpack.c.b16 %v109, %v108
  %v125 = vpack.c.b16 %v111, %v110
  %v126 = vpack.c.b16 %v113, %v112
  %v127 = vpack.c.b16 %v115, %v114
  %v128 = vpack.c.b16 %v117, %v116
  %v129 = vpack.c.b16 %v119, %v118
  %v130 = vpack.c.b16 %v121, %v120
  %v131 = vpack.c.b16 %v123, %v122
  %140 = vmatprep.subr.bf16.mxu0 0
  %141 = vmatpush1.bf16.msra.mxu0 %v131
  %142 = vmatprep.subr.bf16.mxu0 0
  %143 = vmatpush1.bf16.msra.mxu0 %v130
  %144 = vmatprep.subr.bf16.mxu0 0
  %145 = vmatpush1.bf16.msra.mxu0 %v129
  %146 = vmatprep.subr.bf16.mxu0 0
  %147 = vmatpush1.bf16.msra.mxu0 %v128
  %148 = vmatprep.subr.bf16.mxu0 0
  %149 = vmatpush1.bf16.msra.mxu0 %v127
  %150 = vmatprep.subr.bf16.mxu0 0
  %151 = vmatpush1.bf16.msra.mxu0 %v126
  %152 = vmatprep.subr.bf16.mxu0 0
  %153 = vmatpush1.bf16.msra.mxu0 %v125
  %154 = vmatprep.subr.bf16.mxu0 0
  %155 = vmatpush1.bf16.msra.mxu0 %v124
  %156 = vmatprep.subr.bf16.mxu0 0
  %157 = vmatpush2.bf16.msra.mxu0 0
  %158 = vmatprep.subr.bf16.mxu0 0
  %159 = vmatpush2.bf16.msra.mxu0 0
  %160 = vmatprep.subr.bf16.mxu0 0
  %161 = vmatpush2.bf16.msra.mxu0 0
  %162 = vmatprep.subr.bf16.mxu0 0
  %163 = vmatpush2.bf16.msra.mxu0 0
  %164 = vmatprep.subr.bf16.mxu0 0
  %165 = vmatpush2.bf16.msra.mxu0 0
  %166 = vmatprep.subr.bf16.mxu0 0
  %167 = vmatpush2.bf16.msra.mxu0 0
  %168 = vmatprep.subr.bf16.mxu0 0
  %169 = vmatpush2.bf16.msra.mxu0 0
  %170 = vmatprep.subr.bf16.mxu0 0
  %171 = vmatpush2.bf16.msra.mxu0 0
  %172 = vmatprep.mubr.bf16.mxu0 0
  %173 = vmatmul.mubr.bf16.gmra.mxu0 %v76
  %v174 = vpop.f32.mrf.mxu0
  %v175 = vadd.f32 0.0, %v174
  %v176 = vpop.f32.mrf.mxu0
  %v177 = vpop.f32.mrf.mxu0
  %v178 = vadd.f32 0.0, %v177
  %v179 = vpop.f32.mrf.mxu0
  %180 = vmatprep.mubr.bf16.mxu0 0
  %181 = vmatmul.mubr.bf16.gmra.mxu0 %v77
  %v182 = vpop.f32.mrf.mxu0
  %v183 = vadd.f32 0.0, %v182
  %v184 = vpop.f32.mrf.mxu0
  %v185 = vpop.f32.mrf.mxu0
  %v186 = vadd.f32 0.0, %v185
  %v187 = vpop.f32.mrf.mxu0
  %188 = vmatprep.mubr.bf16.mxu0 0
  %189 = vmatmul.mubr.bf16.gmra.mxu0 %v78
  %v190 = vpop.f32.mrf.mxu0
  %v191 = vadd.f32 0.0, %v190
  %v192 = vpop.f32.mrf.mxu0
  %v193 = vpop.f32.mrf.mxu0
  %v194 = vadd.f32 0.0, %v193
  %v195 = vpop.f32.mrf.mxu0
  %196 = vmatprep.mubr.bf16.mxu0 0
  %197 = vmatmul.mubr.bf16.gmra.mxu0 %v79
  %v198 = vpop.f32.mrf.mxu0
  %v199 = vadd.f32 0.0, %v198
  %v200 = vpop.f32.mrf.mxu0
  %v201 = vpop.f32.mrf.mxu0
  %v202 = vadd.f32 0.0, %v201
  %v203 = vpop.f32.mrf.mxu0
  %204 = vmatprep.mubr.bf16.mxu0 0
  %205 = vmatmul.mubr.bf16.gmra.mxu0 %v80
  %v206 = vpop.f32.mrf.mxu0
  %v207 = vadd.f32 0.0, %v206
  %v208 = vpop.f32.mrf.mxu0
  %v209 = vpop.f32.mrf.mxu0
  %v210 = vadd.f32 0.0, %v209
  %v211 = vpop.f32.mrf.mxu0
  %212 = vmatprep.mubr.bf16.mxu0 0
  %213 = vmatmul.mubr.bf16.gmra.mxu0 %v81
  %v214 = vpop.f32.mrf.mxu0
  %v215 = vadd.f32 0.0, %v214
  %v216 = vpop.f32.mrf.mxu0
  %v217 = vpop.f32.mrf.mxu0
  %v218 = vadd.f32 0.0, %v217
  %v219 = vpop.f32.mrf.mxu0
  %220 = vmatprep.mubr.bf16.mxu0 0
  %221 = vmatmul.mubr.bf16.gmra.mxu0 %v82
  %v222 = vpop.f32.mrf.mxu0
  %v223 = vadd.f32 0.0, %v222
  %v224 = vpop.f32.mrf.mxu0
  %v225 = vpop.f32.mrf.mxu0
  %v226 = vadd.f32 0.0, %v225
  %v227 = vpop.f32.mrf.mxu0
  %228 = vmatprep.mubr.bf16.mxu0 0
  %229 = vmatmul.mubr.bf16.gmra.mxu0 %v83
  %v230 = vpop.f32.mrf.mxu0
  %v231 = vadd.f32 0.0, %v230
  %v232 = vpop.f32.mrf.mxu0
  %v233 = vpop.f32.mrf.mxu0
  %v234 = vadd.f32 0.0, %v233
  %v235 = vpop.f32.mrf.mxu0
  %236 = vdwg.mxu0
  %v237 = vmax.f32 %v175, 0.0
  %v238 = vmax.f32 %v178, 0.0
  %v239 = vmax.f32 %v183, 0.0
  %v240 = vmax.f32 %v186, 0.0
  %v241 = vmax.f32 %v191, 0.0
  %v242 = vmax.f32 %v194, 0.0
  %v243 = vmax.f32 %v199, 0.0
  %v244 = vmax.f32 %v202, 0.0
  %v245 = vmax.f32 %v207, 0.0
  %v246 = vmax.f32 %v210, 0.0
  %v247 = vmax.f32 %v215, 0.0
  %v248 = vmax.f32 %v218, 0.0
  %v249 = vmax.f32 %v223, 0.0
  %v250 = vmax.f32 %v226, 0.0
  %v251 = vmax.f32 %v231, 0.0
  %v252 = vmax.f32 %v234, 0.0
  %253 = vst [vmem:[%s2] sm:$0xff] %v237
  %254 = vst [vmem:[%s2 + $0x8] sm:$0xff] %v238
  %255 = vst [vmem:[%s2 + $0x10] sm:$0xff] %v239
  %256 = vst [vmem:[%s2 + $0x18] sm:$0xff] %v240
  %257 = vst [vmem:[%s2 + $0x20] sm:$0xff] %v241
  %258 = vst [vmem:[%s2 + $0x28] sm:$0xff] %v242
  %259 = vst [vmem:[%s2 + $0x30] sm:$0xff] %v243
  %260 = vst [vmem:[%s2 + $0x38] sm:$0xff] %v244
  %261 = vst [vmem:[%s2 + $0x40] sm:$0xff] %v245
  %262 = vst [vmem:[%s2 + $0x48] sm:$0xff] %v246
  %263 = vst [vmem:[%s2 + $0x50] sm:$0xff] %v247
  %264 = vst [vmem:[%s2 + $0x58] sm:$0xff] %v248
  %265 = vst [vmem:[%s2 + $0x60] sm:$0xff] %v249
  %266 = vst [vmem:[%s2 + $0x68] sm:$0xff] %v250
  %267 = vst [vmem:[%s2 + $0x70] sm:$0xff] %v251
  %268 = vst [vmem:[%s2 + $0x78] sm:$0xff] %v252
  // Predicated region
  $region10: #{unet_innermost_forward.3} parent=0 // pred_check
    _
  $region11: #{unet_innermost_forward.3} parent=0 // pred_check_branch
    %270 = sbr.rel (0) target = $region13
  $region12: #{unet_innermost_forward.3} parent=0 // pred_region
    _
  $region13: #{unet_innermost_forward.3} parent=0 // pred_fallthru
    _
  // Predicated region
  $region14: #{unet_innermost_forward.3} parent=0 // pred_check
    _
  $region15: #{unet_innermost_forward.3} parent=0 // pred_check_branch
    %272 = sbr.rel (0) target = $region17
  $region16: #{unet_innermost_forward.3} parent=0 // pred_region
    _
  $region17: #{unet_innermost_forward.3} parent=0 // pred_fallthru
    _

// kernel: unet_innermost_forward.5
$region0: #{unet_innermost_forward.5}
  #allocation0 [shape = 'u32[]', space=smem, size = 0x4, offset = 0x4, fixed_abs, tag = 'smem constant byte address 0x4 - core index']
  #allocation1 [shape = 'u32[144,128]{1,0:T(1,128)}', space=vmem, size = 0x12000, scoped, tag = 'internal scratch']
  %s0 = inlined_call_operand.vmem [shape: f32[512,128], index: 0, kind: input, shape index: {}]
  %s1 = inlined_call_operand.vmem [shape: f32[1,128], index: 1, kind: input, shape index: {}]
  %s2 = inlined_call_operand.vmem [shape: f32[1,128], index: 2, kind: input, shape index: {}]
  %s3 = inlined_call_operand.vmem [shape: f32[512,128], index: 3, kind: output, shape index: {}]
  %s4 = sld [smem:[#allocation0]]
  $region45: #{unet_innermost_forward.5} parent=0
    _
  %s6 = ssub.s32 1, %s4
  %s7 = scalar_select 0, %s6, %s4
  loop: start=0, step=1, limit=4
  $region2: #{unet_innermost_forward.5} parent=0 // loop_pre_header
    _
  $region3: #{unet_innermost_forward.5} parent=0 // loop_header
    %s9 = sphi 0, %s13
    %p10 = scmp.ge.s32.totalorder %s9, 4
    %s19 = sphi 0, %s21
    %s22 = sphi 0, %s19
    %s23 = sphi 0, %s22
    %s39 = sphi 0, %s23
    %s43 = sphi 0, %s43
    %s45 = sphi 0, %s43
    %s46 = sphi 0, %s45
    %s60 = sphi 0, %s46
    %s64 = sphi 0, %s64
    %s66 = sphi 0, %s64
    %s67 = sphi 0, %s66
    %s81 = sphi 0, %s67
    %s87 = sphi 0, %s89
    %s90 = sphi 0, %s87
    %s91 = sphi 0, %s90
    %s107 = sphi 0, %s91
  $region4: #{unet_innermost_forward.5} parent=0 // loop_header_branch
    %12 = sbr.rel (%p10) target = $region8
  $region5: #{unet_innermost_forward.5} parent=0 // loop_body
    %s14 = ssub.s32 %s9, 1
    %s15 = ssub.s32 %s9, 2
    %s16 = sadd.s32 %s9, 1
    %s17 = ssub.s32 %s9, %s16
    %p18 = scmp.eq.s32.totalorder %s17, 0
    %s20 = sadd.s32 %s19, 1
    %s21 = scalar_select %p18, %s19, %s20
    %p24 = pneg %p18
    %p25 = scmp.eq.s32.totalorder %s9, 1
    %p26 = por %p24, %p25
    %p27 = scmp.ne.s32.totalorder %s19, %s22
    %p28 = scmp.eq.s32.totalorder %s9, 0
    %p29 = por %p27, %p28
    %p30 = scmp.ne.s32.totalorder %s19, %s22
    %p31 = scmp.eq.s32.totalorder %s14, 1
    %p32 = por %p30, %p31
    %p33 = scmp.ne.s32.totalorder %s22, %s23
    %p34 = scmp.eq.s32.totalorder %s14, 0
    %p35 = por %p33, %p34
    %p36 = scmp.ne.s32.totalorder %s22, %s23
    %p37 = scmp.eq.s32.totalorder %s15, 1
    %p38 = por %p36, %p37
    %p40 = scmp.ne.s32.totalorder %s23, %s39
    %p41 = scmp.eq.s32.totalorder %s15, 0
    %p42 = por %p40, %p41
    %s44 = sadd.s32 %s43, 1
    %p47 = scmp.eq.s32.totalorder %s9, 1
    %p48 = scmp.ne.s32.totalorder %s43, %s45
    %p49 = scmp.eq.s32.totalorder %s9, 0
    %p50 = por %p48, %p49
    %p51 = scmp.ne.s32.totalorder %s43, %s45
    %p52 = scmp.eq.s32.totalorder %s14, 1
    %p53 = por %p51, %p52
    %p54 = scmp.ne.s32.totalorder %s45, %s46
    %p55 = scmp.eq.s32.totalorder %s14, 0
    %p56 = por %p54, %p55
    %p57 = scmp.ne.s32.totalorder %s45, %s46
    %p58 = scmp.eq.s32.totalorder %s15, 1
    %p59 = por %p57, %p58
    %p61 = scmp.ne.s32.totalorder %s46, %s60
    %p62 = scmp.eq.s32.totalorder %s15, 0
    %p63 = por %p61, %p62
    %s65 = sadd.s32 %s64, 1
    %p68 = scmp.eq.s32.totalorder %s9, 1
    %p69 = scmp.ne.s32.totalorder %s64, %s66
    %p70 = scmp.eq.s32.totalorder %s9, 0
    %p71 = por %p69, %p70
    %p72 = scmp.ne.s32.totalorder %s64, %s66
    %p73 = scmp.eq.s32.totalorder %s14, 1
    %p74 = por %p72, %p73
    %p75 = scmp.ne.s32.totalorder %s66, %s67
    %p76 = scmp.eq.s32.totalorder %s14, 0
    %p77 = por %p75, %p76
    %p78 = scmp.ne.s32.totalorder %s66, %s67
    %p79 = scmp.eq.s32.totalorder %s15, 1
    %p80 = por %p78, %p79
    %p82 = scmp.ne.s32.totalorder %s67, %s81
    %p83 = scmp.eq.s32.totalorder %s15, 0
    %p84 = por %p82, %p83
    %s85 = ssub.s32 %s9, %s16
    %p86 = scmp.eq.s32.totalorder %s85, 0
    %s88 = sadd.s32 %s87, 1
    %s89 = scalar_select %p86, %s87, %s88
    %p92 = pneg %p86
    %p93 = scmp.eq.s32.totalorder %s9, 1
    %p94 = por %p92, %p93
    %p95 = scmp.ne.s32.totalorder %s87, %s90
    %p96 = scmp.eq.s32.totalorder %s9, 0
    %p97 = por %p95, %p96
    %p98 = scmp.ne.s32.totalorder %s87, %s90
    %p99 = scmp.eq.s32.totalorder %s14, 1
    %p100 = por %p98, %p99
    %p101 = scmp.ne.s32.totalorder %s90, %s91
    %p102 = scmp.eq.s32.totalorder %s14, 0
    %p103 = por %p101, %p102
    %p104 = scmp.ne.s32.totalorder %s90, %s91
    %p105 = scmp.eq.s32.totalorder %s15, 1
    %p106 = por %p104, %p105
    %p108 = scmp.ne.s32.totalorder %s91, %s107
    %p109 = scmp.eq.s32.totalorder %s15, 0
    %p110 = por %p108, %p109
    %p111 = scmp.le.s32.totalorder 1, %s9
    %p112 = scmp.lt.s32.totalorder %s9, 3
    %p113 = pnand %p111, %p112
    %p114 = pneg %p113
    // Predicated region
    $region9: #{unet_innermost_forward.5} parent=5 // pred_check
      _
    $region10: #{unet_innermost_forward.5} parent=5 // pred_check_branch
      %116 = sbr.rel (%p113) target = $region12
    $region11: #{unet_innermost_forward.5} parent=5 // pred_region
      %s117 = ssub.s32 %s9, 1
      // Predicated region
      $region13: #{unet_innermost_forward.5} parent=11 // pred_check
        %p118 = pneg %p56
      $region14: #{unet_innermost_forward.5} parent=11 // pred_check_branch
        %120 = sbr.rel (%p118) target = $region16
      $region15: #{unet_innermost_forward.5} parent=11 // pred_region
        _
      $region16: #{unet_innermost_forward.5} parent=11 // pred_fallthru
        _
      // Predicated region
      $region17: #{unet_innermost_forward.5} parent=11 // pred_check
        %p121 = pneg %p77
      $region18: #{unet_innermost_forward.5} parent=11 // pred_check_branch
        %123 = sbr.rel (%p121) target = $region20
      $region19: #{unet_innermost_forward.5} parent=11 // pred_region
        _
      $region20: #{unet_innermost_forward.5} parent=11 // pred_fallthru
        _
    $region12: #{unet_innermost_forward.5} parent=5 // pred_fallthru
      _
    %p124 = scmp.lt.s32.totalorder %s9, 2
    // Predicated region
    $region21: #{unet_innermost_forward.5} parent=5 // pred_check
      %p125 = pneg %p124
    $region22: #{unet_innermost_forward.5} parent=5 // pred_check_branch
      %127 = sbr.rel (%p125) target = $region24
    $region23: #{unet_innermost_forward.5} parent=5 // pred_region
      // Predicated region
      $region25: #{unet_innermost_forward.5} parent=23 // pred_check
        %p128 = pneg %p29
      $region26: #{unet_innermost_forward.5} parent=23 // pred_check_branch
        %130 = sbr.rel (%p128) target = $region28
      $region27: #{unet_innermost_forward.5} parent=23 // pred_region
        %s131 = smul.u32 32, %s9
        %p132 = scmp.lt.s32.totalorder %s131, 63
        %s133 = scalar_select %p132, %s131, 63
        %s134 = smul.addr %s133, 8
        %s135 = scalar_lea.vmem %s0, %s134
        %s136 = smul.u32 32, %s9
      $region28: #{unet_innermost_forward.5} parent=23 // pred_fallthru
        _
    $region24: #{unet_innermost_forward.5} parent=5 // pred_fallthru
      _
    %p137 = scmp.le.s32.totalorder 1, %s9
    %p138 = scmp.lt.s32.totalorder %s9, 3
    %p139 = pnand %p137, %p138
    %p140 = pneg %p139
    // Predicated region
    $region29: #{unet_innermost_forward.5} parent=5 // pred_check
      _
    $region30: #{unet_innermost_forward.5} parent=5 // pred_check_branch
      %142 = sbr.rel (%p139) target = $region32
    $region31: #{unet_innermost_forward.5} parent=5 // pred_region
      %s143 = ssub.s32 %s9, 1
      %s144 = smul.u32 32, %s14
      %p145 = scmp.lt.s32.totalorder %s144, 63
      %s146 = scalar_select %p145, %s144, 63
      %s147 = smul.addr %s146, 8
      %s148 = scalar_lea.vmem %s0, %s147
      %p149 = pneg %p35
      %p150 = pneg %p32
      %p151 = pneg %p56
      %p152 = pneg %p53
      %p153 = pneg %p77
      %p154 = pneg %p74
      %p155 = pneg %p103
      %p156 = pneg %p100
      %s157 = smul.u32 32, %s14
      %p158 = scmp.lt.s32.totalorder %s157, 63
      %s159 = scalar_select %p158, %s157, 63
      %s160 = smul.addr %s159, 8
      %s161 = scalar_lea.vmem %s3, %s160
      %s162 = smul.u32 32, %s14
      %p163 = scmp.lt.s32.totalorder %s162, 63
      %s164 = scalar_select %p163, %s162, 63
      %s165 = smul.addr %s164, 8
      %s166 = scalar_lea.vmem %s0, %s165
      %s167 = smul.u32 32, %s14
      %s168 = smul.u32 32, %s14
      %p169 = scmp.lt.s32.totalorder %s168, 63
      %s170 = scalar_select %p169, %s168, 63
      %s171 = smul.addr %s170, 8
      %s172 = scalar_lea.vmem %s3, %s171
      %s173 = smul.u32 32, %s14
      %v174 = vld [vmem:[%s166] sm:$0xff]
      %v175 = vld [vmem:[%s166 + $0x8] sm:$0xff]
      %v176 = vld [vmem:[%s166 + $0x10] sm:$0xff]
      %v177 = vld [vmem:[%s166 + $0x18] sm:$0xff]
      %v178 = vld [vmem:[%s166 + $0x20] sm:$0xff]
      %v179 = vld [vmem:[%s166 + $0x28] sm:$0xff]
      %v180 = vld [vmem:[%s166 + $0x30] sm:$0xff]
      %v181 = vld [vmem:[%s166 + $0x38] sm:$0xff]
      %v182 = vld [vmem:[%s166 + $0x40] sm:$0xff]
      %v183 = vld [vmem:[%s166 + $0x48] sm:$0xff]
      %v184 = vld [vmem:[%s166 + $0x50] sm:$0xff]
      %v185 = vld [vmem:[%s166 + $0x58] sm:$0xff]
      %v186 = vld [vmem:[%s166 + $0x60] sm:$0xff]
      %v187 = vld [vmem:[%s166 + $0x68] sm:$0xff]
      %v188 = vld [vmem:[%s166 + $0x70] sm:$0xff]
      %v189 = vld [vmem:[%s166 + $0x78] sm:$0xff]
      %v190 = vld [vmem:[%s166 + $0x80] sm:$0xff]
      %v191 = vld [vmem:[%s166 + $0x88] sm:$0xff]
      %v192 = vld [vmem:[%s166 + $0x90] sm:$0xff]
      %v193 = vld [vmem:[%s166 + $0x98] sm:$0xff]
      %v194 = vld [vmem:[%s166 + $0xa0] sm:$0xff]
      %v195 = vld [vmem:[%s166 + $0xa8] sm:$0xff]
      %v196 = vld [vmem:[%s166 + $0xb0] sm:$0xff]
      %v197 = vld [vmem:[%s166 + $0xb8] sm:$0xff]
      %v198 = vld [vmem:[%s166 + $0xc0] sm:$0xff]
      %v199 = vld [vmem:[%s166 + $0xc8] sm:$0xff]
      %v200 = vld [vmem:[%s166 + $0xd0] sm:$0xff]
      %v201 = vld [vmem:[%s166 + $0xd8] sm:$0xff]
      %v202 = vld [vmem:[%s166 + $0xe0] sm:$0xff]
      %v203 = vld [vmem:[%s166 + $0xe8] sm:$0xff]
      %v204 = vld [vmem:[%s166 + $0xf0] sm:$0xff]
      %v205 = vld [vmem:[%s166 + $0xf8] sm:$0xff]
      %v206 = vld [vmem:[%s1] sm:$0x1]
      %v208 = vlaneseq
      %v209 = vshrl.u32 %v208, 7
      %v210 = vsub.s32 0, %v209
      %v211 = vrot.slane %v206, %v210
      %v213 = vmul.f32 %v174, %v211
      %v214 = vmul.f32 %v175, %v211
      %v215 = vmul.f32 %v176, %v211
      %v216 = vmul.f32 %v177, %v211
      %v217 = vmul.f32 %v178, %v211
      %v218 = vmul.f32 %v179, %v211
      %v219 = vmul.f32 %v180, %v211
      %v220 = vmul.f32 %v181, %v211
      %v221 = vmul.f32 %v182, %v211
      %v222 = vmul.f32 %v183, %v211
      %v223 = vmul.f32 %v184, %v211
      %v224 = vmul.f32 %v185, %v211
      %v225 = vmul.f32 %v186, %v211
      %v226 = vmul.f32 %v187, %v211
      %v227 = vmul.f32 %v188, %v211
      %v228 = vmul.f32 %v189, %v211
      %v229 = vmul.f32 %v190, %v211
      %v230 = vmul.f32 %v191, %v211
      %v231 = vmul.f32 %v192, %v211
      %v232 = vmul.f32 %v193, %v211
      %v233 = vmul.f32 %v194, %v211
      %v234 = vmul.f32 %v195, %v211
      %v235 = vmul.f32 %v196, %v211
      %v236 = vmul.f32 %v197, %v211
      %v237 = vmul.f32 %v198, %v211
      %v238 = vmul.f32 %v199, %v211
      %v239 = vmul.f32 %v200, %v211
      %v240 = vmul.f32 %v201, %v211
      %v241 = vmul.f32 %v202, %v211
      %v242 = vmul.f32 %v203, %v211
      %v243 = vmul.f32 %v204, %v211
      %v244 = vmul.f32 %v205, %v211
      %v245 = vld [vmem:[%s2] sm:$0x1]
      %v247 = vlaneseq
      %v248 = vshrl.u32 %v247, 7
      %v249 = vsub.s32 0, %v248
      %v250 = vrot.slane %v245, %v249
      %v252 = vadd.f32 %v213, %v250
      %v253 = vadd.f32 %v214, %v250
      %v254 = vadd.f32 %v215, %v250
      %v255 = vadd.f32 %v216, %v250
      %v256 = vadd.f32 %v217, %v250
      %v257 = vadd.f32 %v218, %v250
      %v258 = vadd.f32 %v219, %v250
      %v259 = vadd.f32 %v220, %v250
      %v260 = vadd.f32 %v221, %v250
      %v261 = vadd.f32 %v222, %v250
      %v262 = vadd.f32 %v223, %v250
      %v263 = vadd.f32 %v224, %v250
      %v264 = vadd.f32 %v225, %v250
      %v265 = vadd.f32 %v226, %v250
      %v266 = vadd.f32 %v227, %v250
      %v267 = vadd.f32 %v228, %v250
      %v268 = vadd.f32 %v229, %v250
      %v269 = vadd.f32 %v230, %v250
      %v270 = vadd.f32 %v231, %v250
      %v271 = vadd.f32 %v232, %v250
      %v272 = vadd.f32 %v233, %v250
      %v273 = vadd.f32 %v234, %v250
      %v274 = vadd.f32 %v235, %v250
      %v275 = vadd.f32 %v236, %v250
      %v276 = vadd.f32 %v237, %v250
      %v277 = vadd.f32 %v238, %v250
      %v278 = vadd.f32 %v239, %v250
      %v279 = vadd.f32 %v240, %v250
      %v280 = vadd.f32 %v241, %v250
      %v281 = vadd.f32 %v242, %v250
      %v282 = vadd.f32 %v243, %v250
      %v283 = vadd.f32 %v244, %v250
      %284 = vst [vmem:[%s172] sm:$0xff] %v252
      %285 = vst [vmem:[%s172 + $0x8] sm:$0xff] %v253
      %286 = vst [vmem:[%s172 + $0x10] sm:$0xff] %v254
      %287 = vst [vmem:[%s172 + $0x18] sm:$0xff] %v255
      %288 = vst [vmem:[%s172 + $0x20] sm:$0xff] %v256
      %289 = vst [vmem:[%s172 + $0x28] sm:$0xff] %v257
      %290 = vst [vmem:[%s172 + $0x30] sm:$0xff] %v258
      %291 = vst [vmem:[%s172 + $0x38] sm:$0xff] %v259
      %292 = vst [vmem:[%s172 + $0x40] sm:$0xff] %v260
      %293 = vst [vmem:[%s172 + $0x48] sm:$0xff] %v261
      %294 = vst [vmem:[%s172 + $0x50] sm:$0xff] %v262
      %295 = vst [vmem:[%s172 + $0x58] sm:$0xff] %v263
      %296 = vst [vmem:[%s172 + $0x60] sm:$0xff] %v264
      %297 = vst [vmem:[%s172 + $0x68] sm:$0xff] %v265
      %298 = vst [vmem:[%s172 + $0x70] sm:$0xff] %v266
      %299 = vst [vmem:[%s172 + $0x78] sm:$0xff] %v267
      %300 = vst [vmem:[%s172 + $0x80] sm:$0xff] %v268
      %301 = vst [vmem:[%s172 + $0x88] sm:$0xff] %v269
      %302 = vst [vmem:[%s172 + $0x90] sm:$0xff] %v270
      %303 = vst [vmem:[%s172 + $0x98] sm:$0xff] %v271
      %304 = vst [vmem:[%s172 + $0xa0] sm:$0xff] %v272
      %305 = vst [vmem:[%s172 + $0xa8] sm:$0xff] %v273
      %306 = vst [vmem:[%s172 + $0xb0] sm:$0xff] %v274
      %307 = vst [vmem:[%s172 + $0xb8] sm:$0xff] %v275
      %308 = vst [vmem:[%s172 + $0xc0] sm:$0xff] %v276
      %309 = vst [vmem:[%s172 + $0xc8] sm:$0xff] %v277
      %310 = vst [vmem:[%s172 + $0xd0] sm:$0xff] %v278
      %311 = vst [vmem:[%s172 + $0xd8] sm:$0xff] %v279
      %312 = vst [vmem:[%s172 + $0xe0] sm:$0xff] %v280
      %313 = vst [vmem:[%s172 + $0xe8] sm:$0xff] %v281
      %314 = vst [vmem:[%s172 + $0xf0] sm:$0xff] %v282
      %315 = vst [vmem:[%s172 + $0xf8] sm:$0xff] %v283
      %s316 = smul.u32 32, %s14
      %p317 = scmp.lt.s32.totalorder %s316, 63
      %s318 = scalar_select %p317, %s316, 63
      %s319 = smul.addr %s318, 8
      %s320 = scalar_lea.vmem %s3, %s319
      // Predicated region
      $region33: #{unet_innermost_forward.5} parent=31 // pred_check
        %p321 = pneg %p100
      $region34: #{unet_innermost_forward.5} parent=31 // pred_check_branch
        %323 = sbr.rel (%p321) target = $region36
      $region35: #{unet_innermost_forward.5} parent=31 // pred_region
        %s324 = smul.u32 32, %s14
      $region36: #{unet_innermost_forward.5} parent=31 // pred_fallthru
        _
    $region32: #{unet_innermost_forward.5} parent=5 // pred_fallthru
      _
    %p325 = scmp.le.s32.totalorder 2, %s9
    // Predicated region
    $region37: #{unet_innermost_forward.5} parent=5 // pred_check
      %p326 = pneg %p325
    $region38: #{unet_innermost_forward.5} parent=5 // pred_check_branch
      %328 = sbr.rel (%p326) target = $region40
    $region39: #{unet_innermost_forward.5} parent=5 // pred_region
      %s329 = ssub.s32 %s9, 2
      // Predicated region
      $region41: #{unet_innermost_forward.5} parent=39 // pred_check
        %p330 = pneg %p106
      $region42: #{unet_innermost_forward.5} parent=39 // pred_check_branch
        %332 = sbr.rel (%p330) target = $region44
      $region43: #{unet_innermost_forward.5} parent=39 // pred_region
        %s333 = smul.u32 32, %s15
        %p334 = scmp.lt.s32.totalorder %s333, 63
        %s335 = scalar_select %p334, %s333, 63
        %s336 = smul.addr %s335, 8
        %s337 = scalar_lea.vmem %s3, %s336
      $region44: #{unet_innermost_forward.5} parent=39 // pred_fallthru
        _
    $region40: #{unet_innermost_forward.5} parent=5 // pred_fallthru
      _
  $region6: #{unet_innermost_forward.5} parent=0 // loop_footer
    %s13 = sadd.s32 1, %s9
  $region7: #{unet_innermost_forward.5} parent=0 // loop_footer_branch
    %8 = sbr.rel target = $region3
  $region8: #{unet_innermost_forward.5} parent=0 // loop_exit
    _

// kernel: unet_innermost_forward.4
$region0: #{unet_innermost_forward.4}
  #allocation0 [shape = 'u32[]', space=smem, size = 0x4, offset = 0x4, fixed_abs, tag = 'smem constant byte address 0x4 - core index']
  #allocation1 [shape = 'u32[144,128]{1,0:T(1,128)}', space=vmem, size = 0x12000, scoped, tag = 'internal scratch']
  %s0 = inlined_call_operand.vmem [shape: bf16[512,128], index: 0, kind: input, shape index: {}]
  %s1 = inlined_call_operand.vmem [shape: bf16[128,128], index: 1, kind: input, shape index: {}]
  %s2 = inlined_call_operand.vmem [shape: f32[512,128], index: 2, kind: output, shape index: {0}]
  %s3 = inlined_call_operand.vmem [shape: f32[2,2,128], index: 3, kind: output, shape index: {1}]
  %4 = xla_tuple %s2, %s3
  %s5 = sld [smem:[#allocation0]]
  $region49: #{unet_innermost_forward.4} parent=0
    _
  %s7 = ssub.s32 1, %s5
  %s8 = scalar_select 0, %s7, %s5
  loop: start=0, step=1, limit=4
  $region2: #{unet_innermost_forward.4} parent=0 // loop_pre_header
    _
  $region3: #{unet_innermost_forward.4} parent=0 // loop_header
    %s10 = sphi 0, %s14
    %p11 = scmp.ge.s32.totalorder %s10, 4
    %s20 = sphi 0, %s22
    %s23 = sphi 0, %s20
    %s24 = sphi 0, %s23
    %s40 = sphi 0, %s24
    %s44 = sphi 0, %s44
    %s46 = sphi 0, %s44
    %s47 = sphi 0, %s46
    %s61 = sphi 0, %s47
    %s67 = sphi 0, %s69
    %s70 = sphi 0, %s67
    %s71 = sphi 0, %s70
    %s87 = sphi 0, %s71
    %s93 = sphi 0, %s95
    %s96 = sphi 0, %s93
    %s97 = sphi 0, %s96
    %s113 = sphi 0, %s97
  $region4: #{unet_innermost_forward.4} parent=0 // loop_header_branch
    %13 = sbr.rel (%p11) target = $region8
  $region5: #{unet_innermost_forward.4} parent=0 // loop_body
    %s15 = ssub.s32 %s10, 1
    %s16 = ssub.s32 %s10, 2
    %s17 = sadd.s32 %s10, 1
    %s18 = ssub.s32 %s10, %s17
    %p19 = scmp.eq.s32.totalorder %s18, 0
    %s21 = sadd.s32 %s20, 1
    %s22 = scalar_select %p19, %s20, %s21
    %p25 = pneg %p19
    %p26 = scmp.eq.s32.totalorder %s10, 1
    %p27 = por %p25, %p26
    %p28 = scmp.ne.s32.totalorder %s20, %s23
    %p29 = scmp.eq.s32.totalorder %s10, 0
    %p30 = por %p28, %p29
    %p31 = scmp.ne.s32.totalorder %s20, %s23
    %p32 = scmp.eq.s32.totalorder %s15, 1
    %p33 = por %p31, %p32
    %p34 = scmp.ne.s32.totalorder %s23, %s24
    %p35 = scmp.eq.s32.totalorder %s15, 0
    %p36 = por %p34, %p35
    %p37 = scmp.ne.s32.totalorder %s23, %s24
    %p38 = scmp.eq.s32.totalorder %s16, 1
    %p39 = por %p37, %p38
    %p41 = scmp.ne.s32.totalorder %s24, %s40
    %p42 = scmp.eq.s32.totalorder %s16, 0
    %p43 = por %p41, %p42
    %s45 = sadd.s32 %s44, 1
    %p48 = scmp.eq.s32.totalorder %s10, 1
    %p49 = scmp.ne.s32.totalorder %s44, %s46
    %p50 = scmp.eq.s32.totalorder %s10, 0
    %p51 = por %p49, %p50
    %p52 = scmp.ne.s32.totalorder %s44, %s46
    %p53 = scmp.eq.s32.totalorder %s15, 1
    %p54 = por %p52, %p53
    %p55 = scmp.ne.s32.totalorder %s46, %s47
    %p56 = scmp.eq.s32.totalorder %s15, 0
    %p57 = por %p55, %p56
    %p58 = scmp.ne.s32.totalorder %s46, %s47
    %p59 = scmp.eq.s32.totalorder %s16, 1
    %p60 = por %p58, %p59
    %p62 = scmp.ne.s32.totalorder %s47, %s61
    %p63 = scmp.eq.s32.totalorder %s16, 0
    %p64 = por %p62, %p63
    %s65 = ssub.s32 %s10, %s17
    %p66 = scmp.eq.s32.totalorder %s65, 0
    %s68 = sadd.s32 %s67, 1
    %s69 = scalar_select %p66, %s67, %s68
    %p72 = pneg %p66
    %p73 = scmp.eq.s32.totalorder %s10, 1
    %p74 = por %p72, %p73
    %p75 = scmp.ne.s32.totalorder %s67, %s70
    %p76 = scmp.eq.s32.totalorder %s10, 0
    %p77 = por %p75, %p76
    %p78 = scmp.ne.s32.totalorder %s67, %s70
    %p79 = scmp.eq.s32.totalorder %s15, 1
    %p80 = por %p78, %p79
    %p81 = scmp.ne.s32.totalorder %s70, %s71
    %p82 = scmp.eq.s32.totalorder %s15, 0
    %p83 = por %p81, %p82
    %p84 = scmp.ne.s32.totalorder %s70, %s71
    %p85 = scmp.eq.s32.totalorder %s16, 1
    %p86 = por %p84, %p85
    %p88 = scmp.ne.s32.totalorder %s71, %s87
    %p89 = scmp.eq.s32.totalorder %s16, 0
    %p90 = por %p88, %p89
    %s91 = ssub.s32 %s10, %s17
    %p92 = scmp.eq.s32.totalorder %s91, 0
    %s94 = sadd.s32 %s93, 1
    %s95 = scalar_select %p92, %s93, %s94
    %p98 = pneg %p92
    %p99 = scmp.eq.s32.totalorder %s10, 1
    %p100 = por %p98, %p99
    %p101 = scmp.ne.s32.totalorder %s93, %s96
    %p102 = scmp.eq.s32.totalorder %s10, 0
    %p103 = por %p101, %p102
    %p104 = scmp.ne.s32.totalorder %s93, %s96
    %p105 = scmp.eq.s32.totalorder %s15, 1
    %p106 = por %p104, %p105
    %p107 = scmp.ne.s32.totalorder %s96, %s97
    %p108 = scmp.eq.s32.totalorder %s15, 0
    %p109 = por %p107, %p108
    %p110 = scmp.ne.s32.totalorder %s96, %s97
    %p111 = scmp.eq.s32.totalorder %s16, 1
    %p112 = por %p110, %p111
    %p114 = scmp.ne.s32.totalorder %s97, %s113
    %p115 = scmp.eq.s32.totalorder %s16, 0
    %p116 = por %p114, %p115
    %p117 = scmp.le.s32.totalorder 1, %s10
    %p118 = scmp.lt.s32.totalorder %s10, 3
    %p119 = pnand %p117, %p118
    %p120 = pneg %p119
    // Predicated region
    $region9: #{unet_innermost_forward.4} parent=5 // pred_check
      _
    $region10: #{unet_innermost_forward.4} parent=5 // pred_check_branch
      %122 = sbr.rel (%p119) target = $region12
    $region11: #{unet_innermost_forward.4} parent=5 // pred_region
      %s123 = ssub.s32 %s10, 1
      // Predicated region
      $region13: #{unet_innermost_forward.4} parent=11 // pred_check
        %p124 = pneg %p57
      $region14: #{unet_innermost_forward.4} parent=11 // pred_check_branch
        %126 = sbr.rel (%p124) target = $region16
      $region15: #{unet_innermost_forward.4} parent=11 // pred_region
        _
      $region16: #{unet_innermost_forward.4} parent=11 // pred_fallthru
        _
    $region12: #{unet_innermost_forward.4} parent=5 // pred_fallthru
      _
    %p127 = scmp.lt.s32.totalorder %s10, 2
    // Predicated region
    $region17: #{unet_innermost_forward.4} parent=5 // pred_check
      %p128 = pneg %p127
    $region18: #{unet_innermost_forward.4} parent=5 // pred_check_branch
      %130 = sbr.rel (%p128) target = $region20
    $region19: #{unet_innermost_forward.4} parent=5 // pred_region
      // Predicated region
      $region21: #{unet_innermost_forward.4} parent=19 // pred_check
        %p131 = pneg %p30
      $region22: #{unet_innermost_forward.4} parent=19 // pred_check_branch
        %133 = sbr.rel (%p131) target = $region24
      $region23: #{unet_innermost_forward.4} parent=19 // pred_region
        %s134 = smul.u32 32, %s10
        %p135 = scmp.lt.s32.totalorder %s134, 63
        %s136 = scalar_select %p135, %s134, 63
        %s137 = smul.addr %s136, 4
        %s138 = scalar_lea.vmem %s0, %s137
        %s139 = smul.u32 32, %s10
      $region24: #{unet_innermost_forward.4} parent=19 // pred_fallthru
        _
    $region20: #{unet_innermost_forward.4} parent=5 // pred_fallthru
      _
    %p140 = scmp.le.s32.totalorder 1, %s10
    %p141 = scmp.lt.s32.totalorder %s10, 3
    %p142 = pnand %p140, %p141
    %p143 = pneg %p142
    // Predicated region
    $region25: #{unet_innermost_forward.4} parent=5 // pred_check
      _
    $region26: #{unet_innermost_forward.4} parent=5 // pred_check_branch
      %145 = sbr.rel (%p142) target = $region28
    $region27: #{unet_innermost_forward.4} parent=5 // pred_region
      %s146 = ssub.s32 %s10, 1
      %s147 = smul.u32 32, %s15
      %p148 = scmp.lt.s32.totalorder %s147, 63
      %s149 = scalar_select %p148, %s147, 63
      %s150 = smul.addr %s149, 4
      %s151 = scalar_lea.vmem %s0, %s150
      %p152 = pneg %p36
      %p153 = pneg %p33
      %p154 = pneg %p57
      %p155 = pneg %p54
      %p156 = pneg %p83
      %p157 = pneg %p80
      %s158 = smul.u32 32, %s15
      %p159 = scmp.lt.s32.totalorder %s158, 63
      %s160 = scalar_select %p159, %s158, 63
      %s161 = smul.addr %s160, 8
      %s162 = scalar_lea.vmem %s2, %s161
      %p163 = pneg %p109
      %p164 = pneg %p106
      %p165 = scmp.lt.s32.totalorder %s15, 1
      %s166 = scalar_select %p165, %s15, 1
      %s167 = smul.addr %s166, 2
      %s168 = scalar_lea.vmem %s3, %s167
      %s169 = smul.u32 32, %s15
      %p170 = scmp.lt.s32.totalorder %s169, 63
      %s171 = scalar_select %p170, %s169, 63
      %s172 = smul.addr %s171, 4
      %s173 = scalar_lea.vmem %s0, %s172
      %s174 = smul.u32 32, %s15
      %s175 = smul.u32 32, %s15
      %p176 = scmp.lt.s32.totalorder %s175, 63
      %s177 = scalar_select %p176, %s175, 63
      %s178 = smul.addr %s177, 8
      %s179 = scalar_lea.vmem %s2, %s178
      %s180 = smul.u32 32, %s15
      %p181 = scmp.lt.s32.totalorder %s15, 1
      %s182 = scalar_select %p181, %s15, 1
      %s183 = smul.addr %s182, 2
      %s184 = scalar_lea.vmem %s3, %s183
      %v186 = vld [vmem:[%s173] sm:$0xf]
      %v187 = vld [vmem:[%s173 + $0x4] sm:$0xf]
      %v188 = vld [vmem:[%s173 + $0x8] sm:$0xf]
      %v189 = vld [vmem:[%s173 + $0xc] sm:$0xf]
      %v190 = vld [vmem:[%s173 + $0x10] sm:$0xf]
      %v191 = vld [vmem:[%s173 + $0x14] sm:$0xf]
      %v192 = vld [vmem:[%s173 + $0x18] sm:$0xf]
      %v193 = vld [vmem:[%s173 + $0x1c] sm:$0xf]
      %v194 = vld [vmem:[%s173 + $0x20] sm:$0xf]
      %v195 = vld [vmem:[%s173 + $0x24] sm:$0xf]
      %v196 = vld [vmem:[%s173 + $0x28] sm:$0xf]
      %v197 = vld [vmem:[%s173 + $0x2c] sm:$0xf]
      %v198 = vld [vmem:[%s173 + $0x30] sm:$0xf]
      %v199 = vld [vmem:[%s173 + $0x34] sm:$0xf]
      %v200 = vld [vmem:[%s173 + $0x38] sm:$0xf]
      %v201 = vld [vmem:[%s173 + $0x3c] sm:$0xf]
      %v202 = vld [vmem:[%s173 + $0x40] sm:$0xf]
      %v203 = vld [vmem:[%s173 + $0x44] sm:$0xf]
      %v204 = vld [vmem:[%s173 + $0x48] sm:$0xf]
      %v205 = vld [vmem:[%s173 + $0x4c] sm:$0xf]
      %v206 = vld [vmem:[%s173 + $0x50] sm:$0xf]
      %v207 = vld [vmem:[%s173 + $0x54] sm:$0xf]
      %v208 = vld [vmem:[%s173 + $0x58] sm:$0xf]
      %v209 = vld [vmem:[%s173 + $0x5c] sm:$0xf]
      %v210 = vld [vmem:[%s173 + $0x60] sm:$0xf]
      %v211 = vld [vmem:[%s173 + $0x64] sm:$0xf]
      %v212 = vld [vmem:[%s173 + $0x68] sm:$0xf]
      %v213 = vld [vmem:[%s173 + $0x6c] sm:$0xf]
      %v214 = vld [vmem:[%s173 + $0x70] sm:$0xf]
      %v215 = vld [vmem:[%s173 + $0x74] sm:$0xf]
      %v216 = vld [vmem:[%s173 + $0x78] sm:$0xf]
      %v217 = vld [vmem:[%s173 + $0x7c] sm:$0xf]
      %v218 = vld [vmem:[%s1] sm:$0xf]
      %v219 = vld [vmem:[%s1 + $0x4] sm:$0xf]
      %v220 = vld [vmem:[%s1 + $0x8] sm:$0xf]
      %v221 = vld [vmem:[%s1 + $0xc] sm:$0xf]
      %v222 = vld [vmem:[%s1 + $0x10] sm:$0xf]
      %v223 = vld [vmem:[%s1 + $0x14] sm:$0xf]
      %v224 = vld [vmem:[%s1 + $0x18] sm:$0xf]
      %v225 = vld [vmem:[%s1 + $0x1c] sm:$0xf]
      %v226 = vld [vmem:[%s1 + $0x20] sm:$0xf]
      %v227 = vld [vmem:[%s1 + $0x24] sm:$0xf]
      %v228 = vld [vmem:[%s1 + $0x28] sm:$0xf]
      %v229 = vld [vmem:[%s1 + $0x2c] sm:$0xf]
      %v230 = vld [vmem:[%s1 + $0x30] sm:$0xf]
      %v231 = vld [vmem:[%s1 + $0x34] sm:$0xf]
      %v232 = vld [vmem:[%s1 + $0x38] sm:$0xf]
      %v233 = vld [vmem:[%s1 + $0x3c] sm:$0xf]
      %v266 = vunpack.c.l.b16 %v186
      %v267 = vunpack.c.l.b16 %v187
      %v268 = vunpack.c.l.b16 %v188
      %v269 = vunpack.c.l.b16 %v189
      %v270 = vunpack.c.l.b16 %v190
      %v271 = vunpack.c.l.b16 %v191
      %v272 = vunpack.c.l.b16 %v192
      %v273 = vunpack.c.l.b16 %v193
      %v274 = vunpack.c.l.b16 %v194
      %v275 = vunpack.c.l.b16 %v195
      %v276 = vunpack.c.l.b16 %v196
      %v277 = vunpack.c.l.b16 %v197
      %v278 = vunpack.c.l.b16 %v198
      %v279 = vunpack.c.l.b16 %v199
      %v280 = vunpack.c.l.b16 %v200
      %v281 = vunpack.c.l.b16 %v201
      %v282 = vunpack.c.l.b16 %v202
      %v283 = vunpack.c.l.b16 %v203
      %v284 = vunpack.c.l.b16 %v204
      %v285 = vunpack.c.l.b16 %v205
      %v286 = vunpack.c.l.b16 %v206
      %v287 = vunpack.c.l.b16 %v207
      %v288 = vunpack.c.l.b16 %v208
      %v289 = vunpack.c.l.b16 %v209
      %v290 = vunpack.c.l.b16 %v210
      %v291 = vunpack.c.l.b16 %v211
      %v292 = vunpack.c.l.b16 %v212
      %v293 = vunpack.c.l.b16 %v213
      %v294 = vunpack.c.l.b16 %v214
      %v295 = vunpack.c.l.b16 %v215
      %v296 = vunpack.c.l.b16 %v216
      %v297 = vunpack.c.l.b16 %v217
      %v298 = vpack.c.b16 %v267, %v266
      %v299 = vpack.c.b16 %v269, %v268
      %v300 = vpack.c.b16 %v271, %v270
      %v301 = vpack.c.b16 %v273, %v272
      %v302 = vpack.c.b16 %v275, %v274
      %v303 = vpack.c.b16 %v277, %v276
      %v304 = vpack.c.b16 %v279, %v278
      %v305 = vpack.c.b16 %v281, %v280
      %v306 = vpack.c.b16 %v283, %v282
      %v307 = vpack.c.b16 %v285, %v284
      %v308 = vpack.c.b16 %v287, %v286
      %v309 = vpack.c.b16 %v289, %v288
      %v310 = vpack.c.b16 %v291, %v290
      %v311 = vpack.c.b16 %v293, %v292
      %v312 = vpack.c.b16 %v295, %v294
      %v313 = vpack.c.b16 %v297, %v296
      %v346 = vunpack.c.l.b16 %v218
      %v347 = vunpack.c.l.b16 %v219
      %v348 = vunpack.c.l.b16 %v220
      %v349 = vunpack.c.l.b16 %v221
      %v350 = vunpack.c.l.b16 %v222
      %v351 = vunpack.c.l.b16 %v223
      %v352 = vunpack.c.l.b16 %v224
      %v353 = vunpack.c.l.b16 %v225
      %v354 = vunpack.c.l.b16 %v226
      %v355 = vunpack.c.l.b16 %v227
      %v356 = vunpack.c.l.b16 %v228
      %v357 = vunpack.c.l.b16 %v229
      %v358 = vunpack.c.l.b16 %v230
      %v359 = vunpack.c.l.b16 %v231
      %v360 = vunpack.c.l.b16 %v232
      %v361 = vunpack.c.l.b16 %v233
      %v362 = vpack.c.b16 %v347, %v346
      %v363 = vpack.c.b16 %v349, %v348
      %v364 = vpack.c.b16 %v351, %v350
      %v365 = vpack.c.b16 %v353, %v352
      %v366 = vpack.c.b16 %v355, %v354
      %v367 = vpack.c.b16 %v357, %v356
      %v368 = vpack.c.b16 %v359, %v358
      %v369 = vpack.c.b16 %v361, %v360
      %378 = vmatprep.subr.bf16.mxu0 0
      %379 = vmatpush1.bf16.msra.mxu0 %v369
      %380 = vmatprep.subr.bf16.mxu0 0
      %381 = vmatpush1.bf16.msra.mxu0 %v368
      %382 = vmatprep.subr.bf16.mxu0 0
      %383 = vmatpush1.bf16.msra.mxu0 %v367
      %384 = vmatprep.subr.bf16.mxu0 0
      %385 = vmatpush1.bf16.msra.mxu0 %v366
      %386 = vmatprep.subr.bf16.mxu0 0
      %387 = vmatpush1.bf16.msra.mxu0 %v365
      %388 = vmatprep.subr.bf16.mxu0 0
      %389 = vmatpush1.bf16.msra.mxu0 %v364
      %390 = vmatprep.subr.bf16.mxu0 0
      %391 = vmatpush1.bf16.msra.mxu0 %v363
      %392 = vmatprep.subr.bf16.mxu0 0
      %393 = vmatpush1.bf16.msra.mxu0 %v362
      %394 = vmatprep.subr.bf16.mxu0 0
      %395 = vmatpush2.bf16.msra.mxu0 0
      %396 = vmatprep.subr.bf16.mxu0 0
      %397 = vmatpush2.bf16.msra.mxu0 0
      %398 = vmatprep.subr.bf16.mxu0 0
      %399 = vmatpush2.bf16.msra.mxu0 0
      %400 = vmatprep.subr.bf16.mxu0 0
      %401 = vmatpush2.bf16.msra.mxu0 0
      %402 = vmatprep.subr.bf16.mxu0 0
      %403 = vmatpush2.bf16.msra.mxu0 0
      %404 = vmatprep.subr.bf16.mxu0 0
      %405 = vmatpush2.bf16.msra.mxu0 0
      %406 = vmatprep.subr.bf16.mxu0 0
      %407 = vmatpush2.bf16.msra.mxu0 0
      %408 = vmatprep.subr.bf16.mxu0 0
      %409 = vmatpush2.bf16.msra.mxu0 0
      %410 = vmatprep.mubr.bf16.mxu0 0
      %411 = vmatmul.mubr.bf16.gmra.mxu0 %v298
      %v412 = vpop.f32.mrf.mxu0
      %v413 = vadd.f32 0.0, %v412
      %v414 = vpop.f32.mrf.mxu0
      %v415 = vpop.f32.mrf.mxu0
      %v416 = vadd.f32 0.0, %v415
      %v417 = vpop.f32.mrf.mxu0
      %418 = vmatprep.mubr.bf16.mxu0 0
      %419 = vmatmul.mubr.bf16.gmra.mxu0 %v299
      %v420 = vpop.f32.mrf.mxu0
      %v421 = vadd.f32 0.0, %v420
      %v422 = vpop.f32.mrf.mxu0
      %v423 = vpop.f32.mrf.mxu0
      %v424 = vadd.f32 0.0, %v423
      %v425 = vpop.f32.mrf.mxu0
      %426 = vmatprep.mubr.bf16.mxu0 0
      %427 = vmatmul.mubr.bf16.gmra.mxu0 %v300
      %v428 = vpop.f32.mrf.mxu0
      %v429 = vadd.f32 0.0, %v428
      %v430 = vpop.f32.mrf.mxu0
      %v431 = vpop.f32.mrf.mxu0
      %v432 = vadd.f32 0.0, %v431
      %v433 = vpop.f32.mrf.mxu0
      %434 = vmatprep.mubr.bf16.mxu0 0
      %435 = vmatmul.mubr.bf16.gmra.mxu0 %v301
      %v436 = vpop.f32.mrf.mxu0
      %v437 = vadd.f32 0.0, %v436
      %v438 = vpop.f32.mrf.mxu0
      %v439 = vpop.f32.mrf.mxu0
      %v440 = vadd.f32 0.0, %v439
      %v441 = vpop.f32.mrf.mxu0
      %442 = vmatprep.mubr.bf16.mxu0 0
      %443 = vmatmul.mubr.bf16.gmra.mxu0 %v302
      %v444 = vpop.f32.mrf.mxu0
      %v445 = vadd.f32 0.0, %v444
      %v446 = vpop.f32.mrf.mxu0
      %v447 = vpop.f32.mrf.mxu0
      %v448 = vadd.f32 0.0, %v447
      %v449 = vpop.f32.mrf.mxu0
      %450 = vmatprep.mubr.bf16.mxu0 0
      %451 = vmatmul.mubr.bf16.gmra.mxu0 %v303
      %v452 = vpop.f32.mrf.mxu0
      %v453 = vadd.f32 0.0, %v452
      %v454 = vpop.f32.mrf.mxu0
      %v455 = vpop.f32.mrf.mxu0
      %v456 = vadd.f32 0.0, %v455
      %v457 = vpop.f32.mrf.mxu0
      %458 = vmatprep.mubr.bf16.mxu0 0
      %459 = vmatmul.mubr.bf16.gmra.mxu0 %v304
      %v460 = vpop.f32.mrf.mxu0
      %v461 = vadd.f32 0.0, %v460
      %v462 = vpop.f32.mrf.mxu0
      %v463 = vpop.f32.mrf.mxu0
      %v464 = vadd.f32 0.0, %v463
      %v465 = vpop.f32.mrf.mxu0
      %466 = vmatprep.mubr.bf16.mxu0 0
      %467 = vmatmul.mubr.bf16.gmra.mxu0 %v305
      %v468 = vpop.f32.mrf.mxu0
      %v469 = vadd.f32 0.0, %v468
      %v470 = vpop.f32.mrf.mxu0
      %v471 = vpop.f32.mrf.mxu0
      %v472 = vadd.f32 0.0, %v471
      %v473 = vpop.f32.mrf.mxu0
      %474 = vmatprep.mubr.bf16.mxu0 0
      %475 = vmatmul.mubr.bf16.gmra.mxu0 %v306
      %v476 = vpop.f32.mrf.mxu0
      %v477 = vadd.f32 0.0, %v476
      %v478 = vpop.f32.mrf.mxu0
      %v479 = vpop.f32.mrf.mxu0
      %v480 = vadd.f32 0.0, %v479
      %v481 = vpop.f32.mrf.mxu0
      %482 = vmatprep.mubr.bf16.mxu0 0
      %483 = vmatmul.mubr.bf16.gmra.mxu0 %v307
      %v484 = vpop.f32.mrf.mxu0
      %v485 = vadd.f32 0.0, %v484
      %v486 = vpop.f32.mrf.mxu0
      %v487 = vpop.f32.mrf.mxu0
      %v488 = vadd.f32 0.0, %v487
      %v489 = vpop.f32.mrf.mxu0
      %490 = vmatprep.mubr.bf16.mxu0 0
      %491 = vmatmul.mubr.bf16.gmra.mxu0 %v308
      %v492 = vpop.f32.mrf.mxu0
      %v493 = vadd.f32 0.0, %v492
      %v494 = vpop.f32.mrf.mxu0
      %v495 = vpop.f32.mrf.mxu0
      %v496 = vadd.f32 0.0, %v495
      %v497 = vpop.f32.mrf.mxu0
      %498 = vmatprep.mubr.bf16.mxu0 0
      %499 = vmatmul.mubr.bf16.gmra.mxu0 %v309
      %v500 = vpop.f32.mrf.mxu0
      %v501 = vadd.f32 0.0, %v500
      %v502 = vpop.f32.mrf.mxu0
      %v503 = vpop.f32.mrf.mxu0
      %v504 = vadd.f32 0.0, %v503
      %v505 = vpop.f32.mrf.mxu0
      %506 = vmatprep.mubr.bf16.mxu0 0
      %507 = vmatmul.mubr.bf16.gmra.mxu0 %v310
      %v508 = vpop.f32.mrf.mxu0
      %v509 = vadd.f32 0.0, %v508
      %v510 = vpop.f32.mrf.mxu0
      %v511 = vpop.f32.mrf.mxu0
      %v512 = vadd.f32 0.0, %v511
      %v513 = vpop.f32.mrf.mxu0
      %514 = vmatprep.mubr.bf16.mxu0 0
      %515 = vmatmul.mubr.bf16.gmra.mxu0 %v311
      %v516 = vpop.f32.mrf.mxu0
      %v517 = vadd.f32 0.0, %v516
      %v518 = vpop.f32.mrf.mxu0
      %v519 = vpop.f32.mrf.mxu0
      %v520 = vadd.f32 0.0, %v519
      %v521 = vpop.f32.mrf.mxu0
      %522 = vmatprep.mubr.bf16.mxu0 0
      %523 = vmatmul.mubr.bf16.gmra.mxu0 %v312
      %v524 = vpop.f32.mrf.mxu0
      %v525 = vadd.f32 0.0, %v524
      %v526 = vpop.f32.mrf.mxu0
      %v527 = vpop.f32.mrf.mxu0
      %v528 = vadd.f32 0.0, %v527
      %v529 = vpop.f32.mrf.mxu0
      %530 = vmatprep.mubr.bf16.mxu0 0
      %531 = vmatmul.mubr.bf16.gmra.mxu0 %v313
      %v532 = vpop.f32.mrf.mxu0
      %v533 = vadd.f32 0.0, %v532
      %v534 = vpop.f32.mrf.mxu0
      %v535 = vpop.f32.mrf.mxu0
      %v536 = vadd.f32 0.0, %v535
      %v537 = vpop.f32.mrf.mxu0
      %538 = vdwg.mxu0
      %539 = vst [vmem:[%s179] sm:$0xff] %v413
      %540 = vst [vmem:[%s179 + $0x8] sm:$0xff] %v416
      %541 = vst [vmem:[%s179 + $0x10] sm:$0xff] %v421
      %542 = vst [vmem:[%s179 + $0x18] sm:$0xff] %v424
      %543 = vst [vmem:[%s179 + $0x20] sm:$0xff] %v429
      %544 = vst [vmem:[%s179 + $0x28] sm:$0xff] %v432
      %545 = vst [vmem:[%s179 + $0x30] sm:$0xff] %v437
      %546 = vst [vmem:[%s179 + $0x38] sm:$0xff] %v440
      %547 = vst [vmem:[%s179 + $0x40] sm:$0xff] %v445
      %548 = vst [vmem:[%s179 + $0x48] sm:$0xff] %v448
      %549 = vst [vmem:[%s179 + $0x50] sm:$0xff] %v453
      %550 = vst [vmem:[%s179 + $0x58] sm:$0xff] %v456
      %551 = vst [vmem:[%s179 + $0x60] sm:$0xff] %v461
      %552 = vst [vmem:[%s179 + $0x68] sm:$0xff] %v464
      %553 = vst [vmem:[%s179 + $0x70] sm:$0xff] %v469
      %554 = vst [vmem:[%s179 + $0x78] sm:$0xff] %v472
      %555 = vst [vmem:[%s179 + $0x80] sm:$0xff] %v477
      %556 = vst [vmem:[%s179 + $0x88] sm:$0xff] %v480
      %557 = vst [vmem:[%s179 + $0x90] sm:$0xff] %v485
      %558 = vst [vmem:[%s179 + $0x98] sm:$0xff] %v488
      %559 = vst [vmem:[%s179 + $0xa0] sm:$0xff] %v493
      %560 = vst [vmem:[%s179 + $0xa8] sm:$0xff] %v496
      %561 = vst [vmem:[%s179 + $0xb0] sm:$0xff] %v501
      %562 = vst [vmem:[%s179 + $0xb8] sm:$0xff] %v504
      %563 = vst [vmem:[%s179 + $0xc0] sm:$0xff] %v509
      %564 = vst [vmem:[%s179 + $0xc8] sm:$0xff] %v512
      %565 = vst [vmem:[%s179 + $0xd0] sm:$0xff] %v517
      %566 = vst [vmem:[%s179 + $0xd8] sm:$0xff] %v520
      %567 = vst [vmem:[%s179 + $0xe0] sm:$0xff] %v525
      %568 = vst [vmem:[%s179 + $0xe8] sm:$0xff] %v528
      %569 = vst [vmem:[%s179 + $0xf0] sm:$0xff] %v533
      %570 = vst [vmem:[%s179 + $0xf8] sm:$0xff] %v536
      %v571 = vadd.f32 %v413, %v416
      %v572 = vadd.f32 %v571, %v421
      %v573 = vadd.f32 %v572, %v424
      %v574 = vadd.f32 %v573, %v429
      %v575 = vadd.f32 %v574, %v432
      %v576 = vadd.f32 %v575, %v437
      %v577 = vadd.f32 %v576, %v440
      %v578 = vadd.f32 %v577, %v445
      %v579 = vadd.f32 %v578, %v448
      %v580 = vadd.f32 %v579, %v453
      %v581 = vadd.f32 %v580, %v456
      %v582 = vadd.f32 %v581, %v461
      %v583 = vadd.f32 %v582, %v464
      %v584 = vadd.f32 %v583, %v469
      %v585 = vadd.f32 %v584, %v472
      %v586 = vadd.f32 %v585, %v477
      %v587 = vadd.f32 %v586, %v480
      %v588 = vadd.f32 %v587, %v485
      %v589 = vadd.f32 %v588, %v488
      %v590 = vadd.f32 %v589, %v493
      %v591 = vadd.f32 %v590, %v496
      %v592 = vadd.f32 %v591, %v501
      %v593 = vadd.f32 %v592, %v504
      %v594 = vadd.f32 %v593, %v509
      %v595 = vadd.f32 %v594, %v512
      %v596 = vadd.f32 %v595, %v517
      %v597 = vadd.f32 %v596, %v520
      %v598 = vadd.f32 %v597, %v525
      %v599 = vadd.f32 %v598, %v528
      %v600 = vadd.f32 %v599, %v533
      %v601 = vadd.f32 %v600, %v536
      %v602 = vrot.slane %v601, 4
      %v603 = vadd.f32 %v601, %v602
      %v604 = vrot.slane %v603, 2
      %v605 = vadd.f32 %v603, %v604
      %v606 = vrot.slane %v605, 1
      %v607 = vadd.f32 %v605, %v606
      %v608 = vmul.f32 %v413, %v413
      %v609 = vmul.f32 %v416, %v416
      %v610 = vmul.f32 %v421, %v421
      %v611 = vmul.f32 %v424, %v424
      %v612 = vmul.f32 %v429, %v429
      %v613 = vmul.f32 %v432, %v432
      %v614 = vmul.f32 %v437, %v437
      %v615 = vmul.f32 %v440, %v440
      %v616 = vmul.f32 %v445, %v445
      %v617 = vmul.f32 %v448, %v448
      %v618 = vmul.f32 %v453, %v453
      %v619 = vmul.f32 %v456, %v456
      %v620 = vmul.f32 %v461, %v461
      %v621 = vmul.f32 %v464, %v464
      %v622 = vmul.f32 %v469, %v469
      %v623 = vmul.f32 %v472, %v472
      %v624 = vmul.f32 %v477, %v477
      %v625 = vmul.f32 %v480, %v480
      %v626 = vmul.f32 %v485, %v485
      %v627 = vmul.f32 %v488, %v488
      %v628 = vmul.f32 %v493, %v493
      %v629 = vmul.f32 %v496, %v496
      %v630 = vmul.f32 %v501, %v501
      %v631 = vmul.f32 %v504, %v504
      %v632 = vmul.f32 %v509, %v509
      %v633 = vmul.f32 %v512, %v512
      %v634 = vmul.f32 %v517, %v517
      %v635 = vmul.f32 %v520, %v520
      %v636 = vmul.f32 %v525, %v525
      %v637 = vmul.f32 %v528, %v528
      %v638 = vmul.f32 %v533, %v533
      %v639 = vmul.f32 %v536, %v536
      %v640 = vadd.f32 %v608, %v609
      %v641 = vadd.f32 %v640, %v610
      %v642 = vadd.f32 %v641, %v611
      %v643 = vadd.f32 %v642, %v612
      %v644 = vadd.f32 %v643, %v613
      %v645 = vadd.f32 %v644, %v614
      %v646 = vadd.f32 %v645, %v615
      %v647 = vadd.f32 %v646, %v616
      %v648 = vadd.f32 %v647, %v617
      %v649 = vadd.f32 %v648, %v618
      %v650 = vadd.f32 %v649, %v619
      %v651 = vadd.f32 %v650, %v620
      %v652 = vadd.f32 %v651, %v621
      %v653 = vadd.f32 %v652, %v622
      %v654 = vadd.f32 %v653, %v623
      %v655 = vadd.f32 %v654, %v624
      %v656 = vadd.f32 %v655, %v625
      %v657 = vadd.f32 %v656, %v626
      %v658 = vadd.f32 %v657, %v627
      %v659 = vadd.f32 %v658, %v628
      %v660 = vadd.f32 %v659, %v629
      %v661 = vadd.f32 %v660, %v630
      %v662 = vadd.f32 %v661, %v631
      %v663 = vadd.f32 %v662, %v632
      %v664 = vadd.f32 %v663, %v633
      %v665 = vadd.f32 %v664, %v634
      %v666 = vadd.f32 %v665, %v635
      %v667 = vadd.f32 %v666, %v636
      %v668 = vadd.f32 %v667, %v637
      %v669 = vadd.f32 %v668, %v638
      %v670 = vadd.f32 %v669, %v639
      %v671 = vrot.slane %v670, 4
      %v672 = vadd.f32 %v670, %v671
      %v673 = vrot.slane %v672, 2
      %v674 = vadd.f32 %v672, %v673
      %v675 = vrot.slane %v674, 1
      %v676 = vadd.f32 %v674, %v675
      %vm677 = vcmask 1040384
      %v678 = vsel %vm677, %v607, %v676
      %679 = vst [vmem:[%s184] sm:$0x3] %v678
      %s680 = smul.u32 32, %s15
      %p681 = scmp.lt.s32.totalorder %s680, 63
      %s682 = scalar_select %p681, %s680, 63
      %s683 = smul.addr %s682, 8
      %s684 = scalar_lea.vmem %s2, %s683
      %p685 = scmp.lt.s32.totalorder %s15, 1
      %s686 = scalar_select %p685, %s15, 1
      %s687 = smul.addr %s686, 2
      %s688 = scalar_lea.vmem %s3, %s687
      // Predicated region
      $region29: #{unet_innermost_forward.4} parent=27 // pred_check
        %p689 = pneg %p80
      $region30: #{unet_innermost_forward.4} parent=27 // pred_check_branch
        %691 = sbr.rel (%p689) target = $region32
      $region31: #{unet_innermost_forward.4} parent=27 // pred_region
        %s692 = smul.u32 32, %s15
      $region32: #{unet_innermost_forward.4} parent=27 // pred_fallthru
        _
      // Predicated region
      $region33: #{unet_innermost_forward.4} parent=27 // pred_check
        %p693 = pneg %p106
      $region34: #{unet_innermost_forward.4} parent=27 // pred_check_branch
        %695 = sbr.rel (%p693) target = $region36
      $region35: #{unet_innermost_forward.4} parent=27 // pred_region
        _
      $region36: #{unet_innermost_forward.4} parent=27 // pred_fallthru
        _
    $region28: #{unet_innermost_forward.4} parent=5 // pred_fallthru
      _
    %p696 = scmp.le.s32.totalorder 2, %s10
    // Predicated region
    $region37: #{unet_innermost_forward.4} parent=5 // pred_check
      %p697 = pneg %p696
    $region38: #{unet_innermost_forward.4} parent=5 // pred_check_branch
      %699 = sbr.rel (%p697) target = $region40
    $region39: #{unet_innermost_forward.4} parent=5 // pred_region
      %s700 = ssub.s32 %s10, 2
      // Predicated region
      $region41: #{unet_innermost_forward.4} parent=39 // pred_check
        %p701 = pneg %p86
      $region42: #{unet_innermost_forward.4} parent=39 // pred_check_branch
        %703 = sbr.rel (%p701) target = $region44
      $region43: #{unet_innermost_forward.4} parent=39 // pred_region
        %s704 = smul.u32 32, %s16
        %p705 = scmp.lt.s32.totalorder %s704, 63
        %s706 = scalar_select %p705, %s704, 63
        %s707 = smul.addr %s706, 8
        %s708 = scalar_lea.vmem %s2, %s707
      $region44: #{unet_innermost_forward.4} parent=39 // pred_fallthru
        _
      // Predicated region
      $region45: #{unet_innermost_forward.4} parent=39 // pred_check
        %p709 = pneg %p112
      $region46: #{unet_innermost_forward.4} parent=39 // pred_check_branch
        %711 = sbr.rel (%p709) target = $region48
      $region47: #{unet_innermost_forward.4} parent=39 // pred_region
        %p712 = scmp.lt.s32.totalorder %s16, 1
        %s713 = scalar_select %p712, %s16, 1
        %s714 = smul.addr %s713, 2
        %s715 = scalar_lea.vmem %s3, %s714
      $region48: #{unet_innermost_forward.4} parent=39 // pred_fallthru
        _
    $region40: #{unet_innermost_forward.4} parent=5 // pred_fallthru
      _
  $region6: #{unet_innermost_forward.4} parent=0 // loop_footer
    %s14 = sadd.s32 1, %s10
  $region7: #{unet_innermost_forward.4} parent=0 // loop_footer_branch
    %9 = sbr.rel target = $region3
  $region8: #{unet_innermost_forward.4} parent=0 // loop_exit
    _

</llo_original>
